<compile_context>
chip_gen: v7x
topology: tpu7x:2x2x1
jax: 0.10.0
libtpu: 0.0.40
codegen_flags: <defaults>
</compile_context>

<pallas_src>
import jax
import jax.numpy as jnp
from jax.experimental import pallas as pl
from jax.experimental.pallas import tpu as pltpu


def _scale_mul_kernel(x_ref, s_ref, o_ref):
    # x_ref: (rows, HW) view of NCHW data; s_ref: (rows, 1) per-row scale.
    # Broadcast along the lane axis on the VPU.
    o_ref[...] = x_ref[...] * s_ref[...]


def channel_scale_mul(x, scale):
    """x: (N, C, H, W), scale: (N, C, 1, 1) -> x * scale, returned in NCHW."""
    N, C, H, W = x.shape
    assert scale.shape == (N, C, 1, 1)
    R = N * C
    HW = H * W

    # Pure views of contiguous NCHW data: no HBM traffic, no transposes.
    x2 = x.reshape(R, HW)        # (N*C, H*W)
    s2 = scale.reshape(R, 1)     # (N*C, 1)

    itemsize = jnp.dtype(x.dtype).itemsize
    cost = pl.CostEstimate(
        flops=R * HW,
        transcendentals=0,
        bytes_accessed=2 * R * HW * itemsize + R * itemsize,
    )

    # VMEM budget for the grid-less path: input + output tiles (each
    # double-buffered by the pipeline) must sit comfortably under v7x's
    # 32 MiB default-scoped VMEM.  8 MiB of payload leaves ample headroom.
    vmem_budget = 8 * 1024 * 1024
    bytes_per_row = 2 * HW * itemsize  # one x row + one out row (scale ~0)
    max_rows = max(8, ((vmem_budget // max(bytes_per_row, 1)) // 8) * 8)

    if R <= max_rows:
        # Whole-array, grid-less: the entire op is one VMEM-resident multiply.
        out2 = pl.pallas_call(
            _scale_mul_kernel,
            out_shape=jax.ShapeDtypeStruct((R, HW), x.dtype),
            in_specs=[
                pl.BlockSpec(memory_space=pltpu.MemorySpace.VMEM),
                pl.BlockSpec(memory_space=pltpu.MemorySpace.VMEM),
            ],
            out_specs=pl.BlockSpec(memory_space=pltpu.MemorySpace.VMEM),
            cost_estimate=cost,
        )(x2, s2)
    else:
        # Scale-up path: stream rows through VMEM with a parallel grid.
        # >=512 rows per tile keeps v5e near its HBM roofline; cap by budget.
        tile_r = min(max_rows, max(512, 8))
        tile_r = (tile_r // 8) * 8
        grid = (pl.cdiv(R, tile_r),)
        out2 = pl.pallas_call(
            _scale_mul_kernel,
            out_shape=jax.ShapeDtypeStruct((R, HW), x.dtype),
            grid=grid,
            in_specs=[
                pl.BlockSpec((tile_r, HW), lambda i: (i, 0)),
                pl.BlockSpec((tile_r, 1), lambda i: (i, 0)),
            ],
            out_specs=pl.BlockSpec((tile_r, HW), lambda i: (i, 0)),
            compiler_params=pltpu.CompilerParams(
                dimension_semantics=("parallel",),
            ),
            cost_estimate=cost,
        )(x2, s2)

    # Reshape back to NCHW (again a pure view).
    return out2.reshape(N, C, H, W)


if __name__ == "__main__":
    key = jax.random.PRNGKey(0)
    k1, k2 = jax.random.split(key)

    # Shapes matching the PyTorch module's forward (already small: ~0.4 MB).
    x612 = jax.random.normal(k1, (1, 2064, 7, 7), dtype=jnp.float32)
    x617 = jax.random.normal(k2, (1, 2064, 1, 1), dtype=jnp.float32)

    out = channel_scale_mul(x612, x617)
    jax.block_until_ready(out)

    # Cross-check against plain JAX broadcasting.
    ref = x612 * x617
    assert out.shape == ref.shape
    assert jnp.allclose(out, ref), "mismatch vs reference"

    print("KERNEL_OK")
</pallas_src>

<mosaic_0001>
module attributes {stable_mosaic.version = 11 : i64} {
  func.func @_scale_mul_kernel(%arg0: memref<2064x49xf32, #tpu.memory_space<vmem>>, %arg1: memref<2064x1xf32, #tpu.memory_space<vmem>>, %arg2: memref<2064x49xf32, #tpu.memory_space<vmem>>) attributes {dimension_semantics = [], scalar_prefetch = 0 : i64, scratch_operands = 0 : i64, tpu.core_type = #tpu.core_type<tc>} {
    %c0 = arith.constant 0 : index
    %c0_0 = arith.constant 0 : index
    %0 = vector.load %arg0[%c0, %c0_0] : memref<2064x49xf32, #tpu.memory_space<vmem>>, vector<2064x49xf32>
    %c0_1 = arith.constant 0 : index
    %c0_2 = arith.constant 0 : index
    %1 = vector.load %arg1[%c0_1, %c0_2] : memref<2064x1xf32, #tpu.memory_space<vmem>>, vector<2064x1xf32>
    %2 = vector.broadcast %1 : vector<2064x1xf32> to vector<2064x49xf32>
    %3 = arith.mulf %0, %2 : vector<2064x49xf32>
    %c0_3 = arith.constant 0 : index
    %c0_4 = arith.constant 0 : index
    %4 = vector.load %arg2[%c0_3, %c0_4] : memref<2064x49xf32, #tpu.memory_space<vmem>>, vector<2064x49xf32>
    tpu.vector_store %arg2[%c0_3, %c0_4], %3 {strides = array<i32>} : memref<2064x49xf32, #tpu.memory_space<vmem>>, vector<2064x49xf32>,
    return
  }
}

</mosaic_0001>

<llo_original>
// kernel: tpu_custom_call.1
$region0: #{tpu_custom_call.1}
  #allocation0 [shape = 'u32[]', space=smem, size = 0x4, offset = 0x4, fixed_abs, tag = 'smem constant byte address 0x4 - core index']
  #allocation1 [shape = 'u32[144,128]{1,0:T(1,128)}', space=vmem, size = 0x12000, scoped, tag = 'internal scratch']
  %s0 = inlined_call_operand.vmem [shape: f32[2064,49], index: 0, kind: input, shape index: {}]
  %s1 = inlined_call_operand.vmem [shape: f32[2064,1], index: 1, kind: input, shape index: {}]
  %s2 = inlined_call_operand.vmem [shape: f32[2064,49], index: 2, kind: output, shape index: {}]
  %s3 = sld [smem:[#allocation0]]
  $region18: #{tpu_custom_call.1} parent=0
    _
  %s5 = ssub.s32 1, %s3
  %s6 = scalar_select 0, %s5, %s3
  // Predicated region
  $region2: #{tpu_custom_call.1} parent=0 // pred_check
    _
  $region3: #{tpu_custom_call.1} parent=0 // pred_check_branch
    %8 = sbr.rel (0) target = $region5
  $region4: #{tpu_custom_call.1} parent=0 // pred_region
    _
  $region5: #{tpu_custom_call.1} parent=0 // pred_fallthru
    _
  // Predicated region
  $region6: #{tpu_custom_call.1} parent=0 // pred_check
    _
  $region7: #{tpu_custom_call.1} parent=0 // pred_check_branch
    %10 = sbr.rel (0) target = $region9
  $region8: #{tpu_custom_call.1} parent=0 // pred_region
    _
  $region9: #{tpu_custom_call.1} parent=0 // pred_fallthru
    _
  %v11 = vld [vmem:[%s0] sm:$0xff]
  %v12 = vld [vmem:[%s0 + $0x8] sm:$0xff]
  %v13 = vld [vmem:[%s0 + $0x10] sm:$0xff]
  %v14 = vld [vmem:[%s0 + $0x18] sm:$0xff]
  %v15 = vld [vmem:[%s0 + $0x20] sm:$0xff]
  %v16 = vld [vmem:[%s0 + $0x28] sm:$0xff]
  %v17 = vld [vmem:[%s0 + $0x30] sm:$0xff]
  %v18 = vld [vmem:[%s0 + $0x38] sm:$0xff]
  %v19 = vld [vmem:[%s0 + $0x40] sm:$0xff]
  %v20 = vld [vmem:[%s0 + $0x48] sm:$0xff]
  %v21 = vld [vmem:[%s0 + $0x50] sm:$0xff]
  %v22 = vld [vmem:[%s0 + $0x58] sm:$0xff]
  %v23 = vld [vmem:[%s0 + $0x60] sm:$0xff]
  %v24 = vld [vmem:[%s0 + $0x68] sm:$0xff]
  %v25 = vld [vmem:[%s0 + $0x70] sm:$0xff]
  %v26 = vld [vmem:[%s0 + $0x78] sm:$0xff]
  %v27 = vld [vmem:[%s0 + $0x80] sm:$0xff]
  %v28 = vld [vmem:[%s0 + $0x88] sm:$0xff]
  %v29 = vld [vmem:[%s0 + $0x90] sm:$0xff]
  %v30 = vld [vmem:[%s0 + $0x98] sm:$0xff]
  %v31 = vld [vmem:[%s0 + $0xa0] sm:$0xff]
  %v32 = vld [vmem:[%s0 + $0xa8] sm:$0xff]
  %v33 = vld [vmem:[%s0 + $0xb0] sm:$0xff]
  %v34 = vld [vmem:[%s0 + $0xb8] sm:$0xff]
  %v35 = vld [vmem:[%s0 + $0xc0] sm:$0xff]
  %v36 = vld [vmem:[%s0 + $0xc8] sm:$0xff]
  %v37 = vld [vmem:[%s0 + $0xd0] sm:$0xff]
  %v38 = vld [vmem:[%s0 + $0xd8] sm:$0xff]
  %v39 = vld [vmem:[%s0 + $0xe0] sm:$0xff]
  %v40 = vld [vmem:[%s0 + $0xe8] sm:$0xff]
  %v41 = vld [vmem:[%s0 + $0xf0] sm:$0xff]
  %v42 = vld [vmem:[%s0 + $0xf8] sm:$0xff]
  %v43 = vld [vmem:[%s0 + $0x100] sm:$0xff]
  %v44 = vld [vmem:[%s0 + $0x108] sm:$0xff]
  %v45 = vld [vmem:[%s0 + $0x110] sm:$0xff]
  %v46 = vld [vmem:[%s0 + $0x118] sm:$0xff]
  %v47 = vld [vmem:[%s0 + $0x120] sm:$0xff]
  %v48 = vld [vmem:[%s0 + $0x128] sm:$0xff]
  %v49 = vld [vmem:[%s0 + $0x130] sm:$0xff]
  %v50 = vld [vmem:[%s0 + $0x138] sm:$0xff]
  %v51 = vld [vmem:[%s0 + $0x140] sm:$0xff]
  %v52 = vld [vmem:[%s0 + $0x148] sm:$0xff]
  %v53 = vld [vmem:[%s0 + $0x150] sm:$0xff]
  %v54 = vld [vmem:[%s0 + $0x158] sm:$0xff]
  %v55 = vld [vmem:[%s0 + $0x160] sm:$0xff]
  %v56 = vld [vmem:[%s0 + $0x168] sm:$0xff]
  %v57 = vld [vmem:[%s0 + $0x170] sm:$0xff]
  %v58 = vld [vmem:[%s0 + $0x178] sm:$0xff]
  %v59 = vld [vmem:[%s0 + $0x180] sm:$0xff]
  %v60 = vld [vmem:[%s0 + $0x188] sm:$0xff]
  %v61 = vld [vmem:[%s0 + $0x190] sm:$0xff]
  %v62 = vld [vmem:[%s0 + $0x198] sm:$0xff]
  %v63 = vld [vmem:[%s0 + $0x1a0] sm:$0xff]
  %v64 = vld [vmem:[%s0 + $0x1a8] sm:$0xff]
  %v65 = vld [vmem:[%s0 + $0x1b0] sm:$0xff]
  %v66 = vld [vmem:[%s0 + $0x1b8] sm:$0xff]
  %v67 = vld [vmem:[%s0 + $0x1c0] sm:$0xff]
  %v68 = vld [vmem:[%s0 + $0x1c8] sm:$0xff]
  %v69 = vld [vmem:[%s0 + $0x1d0] sm:$0xff]
  %v70 = vld [vmem:[%s0 + $0x1d8] sm:$0xff]
  %v71 = vld [vmem:[%s0 + $0x1e0] sm:$0xff]
  %v72 = vld [vmem:[%s0 + $0x1e8] sm:$0xff]
  %v73 = vld [vmem:[%s0 + $0x1f0] sm:$0xff]
  %v74 = vld [vmem:[%s0 + $0x1f8] sm:$0xff]
  %v75 = vld [vmem:[%s0 + $0x200] sm:$0xff]
  %v76 = vld [vmem:[%s0 + $0x208] sm:$0xff]
  %v77 = vld [vmem:[%s0 + $0x210] sm:$0xff]
  %v78 = vld [vmem:[%s0 + $0x218] sm:$0xff]
  %v79 = vld [vmem:[%s0 + $0x220] sm:$0xff]
  %v80 = vld [vmem:[%s0 + $0x228] sm:$0xff]
  %v81 = vld [vmem:[%s0 + $0x230] sm:$0xff]
  %v82 = vld [vmem:[%s0 + $0x238] sm:$0xff]
  %v83 = vld [vmem:[%s0 + $0x240] sm:$0xff]
  %v84 = vld [vmem:[%s0 + $0x248] sm:$0xff]
  %v85 = vld [vmem:[%s0 + $0x250] sm:$0xff]
  %v86 = vld [vmem:[%s0 + $0x258] sm:$0xff]
  %v87 = vld [vmem:[%s0 + $0x260] sm:$0xff]
  %v88 = vld [vmem:[%s0 + $0x268] sm:$0xff]
  %v89 = vld [vmem:[%s0 + $0x270] sm:$0xff]
  %v90 = vld [vmem:[%s0 + $0x278] sm:$0xff]
  %v91 = vld [vmem:[%s0 + $0x280] sm:$0xff]
  %v92 = vld [vmem:[%s0 + $0x288] sm:$0xff]
  %v93 = vld [vmem:[%s0 + $0x290] sm:$0xff]
  %v94 = vld [vmem:[%s0 + $0x298] sm:$0xff]
  %v95 = vld [vmem:[%s0 + $0x2a0] sm:$0xff]
  %v96 = vld [vmem:[%s0 + $0x2a8] sm:$0xff]
  %v97 = vld [vmem:[%s0 + $0x2b0] sm:$0xff]
  %v98 = vld [vmem:[%s0 + $0x2b8] sm:$0xff]
  %v99 = vld [vmem:[%s0 + $0x2c0] sm:$0xff]
  %v100 = vld [vmem:[%s0 + $0x2c8] sm:$0xff]
  %v101 = vld [vmem:[%s0 + $0x2d0] sm:$0xff]
  %v102 = vld [vmem:[%s0 + $0x2d8] sm:$0xff]
  %v103 = vld [vmem:[%s0 + $0x2e0] sm:$0xff]
  %v104 = vld [vmem:[%s0 + $0x2e8] sm:$0xff]
  %v105 = vld [vmem:[%s0 + $0x2f0] sm:$0xff]
  %v106 = vld [vmem:[%s0 + $0x2f8] sm:$0xff]
  %v107 = vld [vmem:[%s0 + $0x300] sm:$0xff]
  %v108 = vld [vmem:[%s0 + $0x308] sm:$0xff]
  %v109 = vld [vmem:[%s0 + $0x310] sm:$0xff]
  %v110 = vld [vmem:[%s0 + $0x318] sm:$0xff]
  %v111 = vld [vmem:[%s0 + $0x320] sm:$0xff]
  %v112 = vld [vmem:[%s0 + $0x328] sm:$0xff]
  %v113 = vld [vmem:[%s0 + $0x330] sm:$0xff]
  %v114 = vld [vmem:[%s0 + $0x338] sm:$0xff]
  %v115 = vld [vmem:[%s0 + $0x340] sm:$0xff]
  %v116 = vld [vmem:[%s0 + $0x348] sm:$0xff]
  %v117 = vld [vmem:[%s0 + $0x350] sm:$0xff]
  %v118 = vld [vmem:[%s0 + $0x358] sm:$0xff]
  %v119 = vld [vmem:[%s0 + $0x360] sm:$0xff]
  %v120 = vld [vmem:[%s0 + $0x368] sm:$0xff]
  %v121 = vld [vmem:[%s0 + $0x370] sm:$0xff]
  %v122 = vld [vmem:[%s0 + $0x378] sm:$0xff]
  %v123 = vld [vmem:[%s0 + $0x380] sm:$0xff]
  %v124 = vld [vmem:[%s0 + $0x388] sm:$0xff]
  %v125 = vld [vmem:[%s0 + $0x390] sm:$0xff]
  %v126 = vld [vmem:[%s0 + $0x398] sm:$0xff]
  %v127 = vld [vmem:[%s0 + $0x3a0] sm:$0xff]
  %v128 = vld [vmem:[%s0 + $0x3a8] sm:$0xff]
  %v129 = vld [vmem:[%s0 + $0x3b0] sm:$0xff]
  %v130 = vld [vmem:[%s0 + $0x3b8] sm:$0xff]
  %v131 = vld [vmem:[%s0 + $0x3c0] sm:$0xff]
  %v132 = vld [vmem:[%s0 + $0x3c8] sm:$0xff]
  %v133 = vld [vmem:[%s0 + $0x3d0] sm:$0xff]
  %v134 = vld [vmem:[%s0 + $0x3d8] sm:$0xff]
  %v135 = vld [vmem:[%s0 + $0x3e0] sm:$0xff]
  %v136 = vld [vmem:[%s0 + $0x3e8] sm:$0xff]
  %v137 = vld [vmem:[%s0 + $0x3f0] sm:$0xff]
  %v138 = vld [vmem:[%s0 + $0x3f8] sm:$0xff]
  %v139 = vld [vmem:[%s0 + $0x400] sm:$0xff]
  %v140 = vld [vmem:[%s0 + $0x408] sm:$0xff]
  %v141 = vld [vmem:[%s0 + $0x410] sm:$0xff]
  %v142 = vld [vmem:[%s0 + $0x418] sm:$0xff]
  %v143 = vld [vmem:[%s0 + $0x420] sm:$0xff]
  %v144 = vld [vmem:[%s0 + $0x428] sm:$0xff]
  %v145 = vld [vmem:[%s0 + $0x430] sm:$0xff]
  %v146 = vld [vmem:[%s0 + $0x438] sm:$0xff]
  %v147 = vld [vmem:[%s0 + $0x440] sm:$0xff]
  %v148 = vld [vmem:[%s0 + $0x448] sm:$0xff]
  %v149 = vld [vmem:[%s0 + $0x450] sm:$0xff]
  %v150 = vld [vmem:[%s0 + $0x458] sm:$0xff]
  %v151 = vld [vmem:[%s0 + $0x460] sm:$0xff]
  %v152 = vld [vmem:[%s0 + $0x468] sm:$0xff]
  %v153 = vld [vmem:[%s0 + $0x470] sm:$0xff]
  %v154 = vld [vmem:[%s0 + $0x478] sm:$0xff]
  %v155 = vld [vmem:[%s0 + $0x480] sm:$0xff]
  %v156 = vld [vmem:[%s0 + $0x488] sm:$0xff]
  %v157 = vld [vmem:[%s0 + $0x490] sm:$0xff]
  %v158 = vld [vmem:[%s0 + $0x498] sm:$0xff]
  %v159 = vld [vmem:[%s0 + $0x4a0] sm:$0xff]
  %v160 = vld [vmem:[%s0 + $0x4a8] sm:$0xff]
  %v161 = vld [vmem:[%s0 + $0x4b0] sm:$0xff]
  %v162 = vld [vmem:[%s0 + $0x4b8] sm:$0xff]
  %v163 = vld [vmem:[%s0 + $0x4c0] sm:$0xff]
  %v164 = vld [vmem:[%s0 + $0x4c8] sm:$0xff]
  %v165 = vld [vmem:[%s0 + $0x4d0] sm:$0xff]
  %v166 = vld [vmem:[%s0 + $0x4d8] sm:$0xff]
  %v167 = vld [vmem:[%s0 + $0x4e0] sm:$0xff]
  %v168 = vld [vmem:[%s0 + $0x4e8] sm:$0xff]
  %v169 = vld [vmem:[%s0 + $0x4f0] sm:$0xff]
  %v170 = vld [vmem:[%s0 + $0x4f8] sm:$0xff]
  %v171 = vld [vmem:[%s0 + $0x500] sm:$0xff]
  %v172 = vld [vmem:[%s0 + $0x508] sm:$0xff]
  %v173 = vld [vmem:[%s0 + $0x510] sm:$0xff]
  %v174 = vld [vmem:[%s0 + $0x518] sm:$0xff]
  %v175 = vld [vmem:[%s0 + $0x520] sm:$0xff]
  %v176 = vld [vmem:[%s0 + $0x528] sm:$0xff]
  %v177 = vld [vmem:[%s0 + $0x530] sm:$0xff]
  %v178 = vld [vmem:[%s0 + $0x538] sm:$0xff]
  %v179 = vld [vmem:[%s0 + $0x540] sm:$0xff]
  %v180 = vld [vmem:[%s0 + $0x548] sm:$0xff]
  %v181 = vld [vmem:[%s0 + $0x550] sm:$0xff]
  %v182 = vld [vmem:[%s0 + $0x558] sm:$0xff]
  %v183 = vld [vmem:[%s0 + $0x560] sm:$0xff]
  %v184 = vld [vmem:[%s0 + $0x568] sm:$0xff]
  %v185 = vld [vmem:[%s0 + $0x570] sm:$0xff]
  %v186 = vld [vmem:[%s0 + $0x578] sm:$0xff]
  %v187 = vld [vmem:[%s0 + $0x580] sm:$0xff]
  %v188 = vld [vmem:[%s0 + $0x588] sm:$0xff]
  %v189 = vld [vmem:[%s0 + $0x590] sm:$0xff]
  %v190 = vld [vmem:[%s0 + $0x598] sm:$0xff]
  %v191 = vld [vmem:[%s0 + $0x5a0] sm:$0xff]
  %v192 = vld [vmem:[%s0 + $0x5a8] sm:$0xff]
  %v193 = vld [vmem:[%s0 + $0x5b0] sm:$0xff]
  %v194 = vld [vmem:[%s0 + $0x5b8] sm:$0xff]
  %v195 = vld [vmem:[%s0 + $0x5c0] sm:$0xff]
  %v196 = vld [vmem:[%s0 + $0x5c8] sm:$0xff]
  %v197 = vld [vmem:[%s0 + $0x5d0] sm:$0xff]
  %v198 = vld [vmem:[%s0 + $0x5d8] sm:$0xff]
  %v199 = vld [vmem:[%s0 + $0x5e0] sm:$0xff]
  %v200 = vld [vmem:[%s0 + $0x5e8] sm:$0xff]
  %v201 = vld [vmem:[%s0 + $0x5f0] sm:$0xff]
  %v202 = vld [vmem:[%s0 + $0x5f8] sm:$0xff]
  %v203 = vld [vmem:[%s0 + $0x600] sm:$0xff]
  %v204 = vld [vmem:[%s0 + $0x608] sm:$0xff]
  %v205 = vld [vmem:[%s0 + $0x610] sm:$0xff]
  %v206 = vld [vmem:[%s0 + $0x618] sm:$0xff]
  %v207 = vld [vmem:[%s0 + $0x620] sm:$0xff]
  %v208 = vld [vmem:[%s0 + $0x628] sm:$0xff]
  %v209 = vld [vmem:[%s0 + $0x630] sm:$0xff]
  %v210 = vld [vmem:[%s0 + $0x638] sm:$0xff]
  %v211 = vld [vmem:[%s0 + $0x640] sm:$0xff]
  %v212 = vld [vmem:[%s0 + $0x648] sm:$0xff]
  %v213 = vld [vmem:[%s0 + $0x650] sm:$0xff]
  %v214 = vld [vmem:[%s0 + $0x658] sm:$0xff]
  %v215 = vld [vmem:[%s0 + $0x660] sm:$0xff]
  %v216 = vld [vmem:[%s0 + $0x668] sm:$0xff]
  %v217 = vld [vmem:[%s0 + $0x670] sm:$0xff]
  %v218 = vld [vmem:[%s0 + $0x678] sm:$0xff]
  %v219 = vld [vmem:[%s0 + $0x680] sm:$0xff]
  %v220 = vld [vmem:[%s0 + $0x688] sm:$0xff]
  %v221 = vld [vmem:[%s0 + $0x690] sm:$0xff]
  %v222 = vld [vmem:[%s0 + $0x698] sm:$0xff]
  %v223 = vld [vmem:[%s0 + $0x6a0] sm:$0xff]
  %v224 = vld [vmem:[%s0 + $0x6a8] sm:$0xff]
  %v225 = vld [vmem:[%s0 + $0x6b0] sm:$0xff]
  %v226 = vld [vmem:[%s0 + $0x6b8] sm:$0xff]
  %v227 = vld [vmem:[%s0 + $0x6c0] sm:$0xff]
  %v228 = vld [vmem:[%s0 + $0x6c8] sm:$0xff]
  %v229 = vld [vmem:[%s0 + $0x6d0] sm:$0xff]
  %v230 = vld [vmem:[%s0 + $0x6d8] sm:$0xff]
  %v231 = vld [vmem:[%s0 + $0x6e0] sm:$0xff]
  %v232 = vld [vmem:[%s0 + $0x6e8] sm:$0xff]
  %v233 = vld [vmem:[%s0 + $0x6f0] sm:$0xff]
  %v234 = vld [vmem:[%s0 + $0x6f8] sm:$0xff]
  %v235 = vld [vmem:[%s0 + $0x700] sm:$0xff]
  %v236 = vld [vmem:[%s0 + $0x708] sm:$0xff]
  %v237 = vld [vmem:[%s0 + $0x710] sm:$0xff]
  %v238 = vld [vmem:[%s0 + $0x718] sm:$0xff]
  %v239 = vld [vmem:[%s0 + $0x720] sm:$0xff]
  %v240 = vld [vmem:[%s0 + $0x728] sm:$0xff]
  %v241 = vld [vmem:[%s0 + $0x730] sm:$0xff]
  %v242 = vld [vmem:[%s0 + $0x738] sm:$0xff]
  %v243 = vld [vmem:[%s0 + $0x740] sm:$0xff]
  %v244 = vld [vmem:[%s0 + $0x748] sm:$0xff]
  %v245 = vld [vmem:[%s0 + $0x750] sm:$0xff]
  %v246 = vld [vmem:[%s0 + $0x758] sm:$0xff]
  %v247 = vld [vmem:[%s0 + $0x760] sm:$0xff]
  %v248 = vld [vmem:[%s0 + $0x768] sm:$0xff]
  %v249 = vld [vmem:[%s0 + $0x770] sm:$0xff]
  %v250 = vld [vmem:[%s0 + $0x778] sm:$0xff]
  %v251 = vld [vmem:[%s0 + $0x780] sm:$0xff]
  %v252 = vld [vmem:[%s0 + $0x788] sm:$0xff]
  %v253 = vld [vmem:[%s0 + $0x790] sm:$0xff]
  %v254 = vld [vmem:[%s0 + $0x798] sm:$0xff]
  %v255 = vld [vmem:[%s0 + $0x7a0] sm:$0xff]
  %v256 = vld [vmem:[%s0 + $0x7a8] sm:$0xff]
  %v257 = vld [vmem:[%s0 + $0x7b0] sm:$0xff]
  %v258 = vld [vmem:[%s0 + $0x7b8] sm:$0xff]
  %v259 = vld [vmem:[%s0 + $0x7c0] sm:$0xff]
  %v260 = vld [vmem:[%s0 + $0x7c8] sm:$0xff]
  %v261 = vld [vmem:[%s0 + $0x7d0] sm:$0xff]
  %v262 = vld [vmem:[%s0 + $0x7d8] sm:$0xff]
  %v263 = vld [vmem:[%s0 + $0x7e0] sm:$0xff]
  %v264 = vld [vmem:[%s0 + $0x7e8] sm:$0xff]
  %v265 = vld [vmem:[%s0 + $0x7f0] sm:$0xff]
  %v266 = vld [vmem:[%s0 + $0x7f8] sm:$0xff]
  %v267 = vld [vmem:[%s0 + $0x800] sm:$0xff]
  %v268 = vld [vmem:[%s0 + $0x808] sm:$0xff]
  %v269 = vld [vmem:[%s1] sm:$0xff]
  %v270 = vld [vmem:[%s1 + $0x8] sm:$0xff]
  %v271 = vld [vmem:[%s1 + $0x10] sm:$0xff]
  %v272 = vld [vmem:[%s1 + $0x18] sm:$0xff]
  %v273 = vld [vmem:[%s1 + $0x20] sm:$0xff]
  %v274 = vld [vmem:[%s1 + $0x28] sm:$0xff]
  %v275 = vld [vmem:[%s1 + $0x30] sm:$0xff]
  %v276 = vld [vmem:[%s1 + $0x38] sm:$0xff]
  %v277 = vld [vmem:[%s1 + $0x40] sm:$0xff]
  %v278 = vld [vmem:[%s1 + $0x48] sm:$0xff]
  %v279 = vld [vmem:[%s1 + $0x50] sm:$0xff]
  %v280 = vld [vmem:[%s1 + $0x58] sm:$0xff]
  %v281 = vld [vmem:[%s1 + $0x60] sm:$0xff]
  %v282 = vld [vmem:[%s1 + $0x68] sm:$0xff]
  %v283 = vld [vmem:[%s1 + $0x70] sm:$0xff]
  %v284 = vld [vmem:[%s1 + $0x78] sm:$0xff]
  %v285 = vld [vmem:[%s1 + $0x80] sm:$0xff]
  %v286 = vld [vmem:[%s1 + $0x88] sm:$0xff]
  %v287 = vld [vmem:[%s1 + $0x90] sm:$0xff]
  %v288 = vld [vmem:[%s1 + $0x98] sm:$0xff]
  %v289 = vld [vmem:[%s1 + $0xa0] sm:$0xff]
  %v290 = vld [vmem:[%s1 + $0xa8] sm:$0xff]
  %v291 = vld [vmem:[%s1 + $0xb0] sm:$0xff]
  %v292 = vld [vmem:[%s1 + $0xb8] sm:$0xff]
  %v293 = vld [vmem:[%s1 + $0xc0] sm:$0xff]
  %v294 = vld [vmem:[%s1 + $0xc8] sm:$0xff]
  %v295 = vld [vmem:[%s1 + $0xd0] sm:$0xff]
  %v296 = vld [vmem:[%s1 + $0xd8] sm:$0xff]
  %v297 = vld [vmem:[%s1 + $0xe0] sm:$0xff]
  %v298 = vld [vmem:[%s1 + $0xe8] sm:$0xff]
  %v299 = vld [vmem:[%s1 + $0xf0] sm:$0xff]
  %v300 = vld [vmem:[%s1 + $0xf8] sm:$0xff]
  %v301 = vld [vmem:[%s1 + $0x100] sm:$0xff]
  %v302 = vld [vmem:[%s1 + $0x108] sm:$0xff]
  %v303 = vld [vmem:[%s1 + $0x110] sm:$0xff]
  %v304 = vld [vmem:[%s1 + $0x118] sm:$0xff]
  %v305 = vld [vmem:[%s1 + $0x120] sm:$0xff]
  %v306 = vld [vmem:[%s1 + $0x128] sm:$0xff]
  %v307 = vld [vmem:[%s1 + $0x130] sm:$0xff]
  %v308 = vld [vmem:[%s1 + $0x138] sm:$0xff]
  %v309 = vld [vmem:[%s1 + $0x140] sm:$0xff]
  %v310 = vld [vmem:[%s1 + $0x148] sm:$0xff]
  %v311 = vld [vmem:[%s1 + $0x150] sm:$0xff]
  %v312 = vld [vmem:[%s1 + $0x158] sm:$0xff]
  %v313 = vld [vmem:[%s1 + $0x160] sm:$0xff]
  %v314 = vld [vmem:[%s1 + $0x168] sm:$0xff]
  %v315 = vld [vmem:[%s1 + $0x170] sm:$0xff]
  %v316 = vld [vmem:[%s1 + $0x178] sm:$0xff]
  %v317 = vld [vmem:[%s1 + $0x180] sm:$0xff]
  %v318 = vld [vmem:[%s1 + $0x188] sm:$0xff]
  %v319 = vld [vmem:[%s1 + $0x190] sm:$0xff]
  %v320 = vld [vmem:[%s1 + $0x198] sm:$0xff]
  %v321 = vld [vmem:[%s1 + $0x1a0] sm:$0xff]
  %v322 = vld [vmem:[%s1 + $0x1a8] sm:$0xff]
  %v323 = vld [vmem:[%s1 + $0x1b0] sm:$0xff]
  %v324 = vld [vmem:[%s1 + $0x1b8] sm:$0xff]
  %v325 = vld [vmem:[%s1 + $0x1c0] sm:$0xff]
  %v326 = vld [vmem:[%s1 + $0x1c8] sm:$0xff]
  %v327 = vld [vmem:[%s1 + $0x1d0] sm:$0xff]
  %v328 = vld [vmem:[%s1 + $0x1d8] sm:$0xff]
  %v329 = vld [vmem:[%s1 + $0x1e0] sm:$0xff]
  %v330 = vld [vmem:[%s1 + $0x1e8] sm:$0xff]
  %v331 = vld [vmem:[%s1 + $0x1f0] sm:$0xff]
  %v332 = vld [vmem:[%s1 + $0x1f8] sm:$0xff]
  %v333 = vld [vmem:[%s1 + $0x200] sm:$0xff]
  %v334 = vld [vmem:[%s1 + $0x208] sm:$0xff]
  %v335 = vld [vmem:[%s1 + $0x210] sm:$0xff]
  %v336 = vld [vmem:[%s1 + $0x218] sm:$0xff]
  %v337 = vld [vmem:[%s1 + $0x220] sm:$0xff]
  %v338 = vld [vmem:[%s1 + $0x228] sm:$0xff]
  %v339 = vld [vmem:[%s1 + $0x230] sm:$0xff]
  %v340 = vld [vmem:[%s1 + $0x238] sm:$0xff]
  %v341 = vld [vmem:[%s1 + $0x240] sm:$0xff]
  %v342 = vld [vmem:[%s1 + $0x248] sm:$0xff]
  %v343 = vld [vmem:[%s1 + $0x250] sm:$0xff]
  %v344 = vld [vmem:[%s1 + $0x258] sm:$0xff]
  %v345 = vld [vmem:[%s1 + $0x260] sm:$0xff]
  %v346 = vld [vmem:[%s1 + $0x268] sm:$0xff]
  %v347 = vld [vmem:[%s1 + $0x270] sm:$0xff]
  %v348 = vld [vmem:[%s1 + $0x278] sm:$0xff]
  %v349 = vld [vmem:[%s1 + $0x280] sm:$0xff]
  %v350 = vld [vmem:[%s1 + $0x288] sm:$0xff]
  %v351 = vld [vmem:[%s1 + $0x290] sm:$0xff]
  %v352 = vld [vmem:[%s1 + $0x298] sm:$0xff]
  %v353 = vld [vmem:[%s1 + $0x2a0] sm:$0xff]
  %v354 = vld [vmem:[%s1 + $0x2a8] sm:$0xff]
  %v355 = vld [vmem:[%s1 + $0x2b0] sm:$0xff]
  %v356 = vld [vmem:[%s1 + $0x2b8] sm:$0xff]
  %v357 = vld [vmem:[%s1 + $0x2c0] sm:$0xff]
  %v358 = vld [vmem:[%s1 + $0x2c8] sm:$0xff]
  %v359 = vld [vmem:[%s1 + $0x2d0] sm:$0xff]
  %v360 = vld [vmem:[%s1 + $0x2d8] sm:$0xff]
  %v361 = vld [vmem:[%s1 + $0x2e0] sm:$0xff]
  %v362 = vld [vmem:[%s1 + $0x2e8] sm:$0xff]
  %v363 = vld [vmem:[%s1 + $0x2f0] sm:$0xff]
  %v364 = vld [vmem:[%s1 + $0x2f8] sm:$0xff]
  %v365 = vld [vmem:[%s1 + $0x300] sm:$0xff]
  %v366 = vld [vmem:[%s1 + $0x308] sm:$0xff]
  %v367 = vld [vmem:[%s1 + $0x310] sm:$0xff]
  %v368 = vld [vmem:[%s1 + $0x318] sm:$0xff]
  %v369 = vld [vmem:[%s1 + $0x320] sm:$0xff]
  %v370 = vld [vmem:[%s1 + $0x328] sm:$0xff]
  %v371 = vld [vmem:[%s1 + $0x330] sm:$0xff]
  %v372 = vld [vmem:[%s1 + $0x338] sm:$0xff]
  %v373 = vld [vmem:[%s1 + $0x340] sm:$0xff]
  %v374 = vld [vmem:[%s1 + $0x348] sm:$0xff]
  %v375 = vld [vmem:[%s1 + $0x350] sm:$0xff]
  %v376 = vld [vmem:[%s1 + $0x358] sm:$0xff]
  %v377 = vld [vmem:[%s1 + $0x360] sm:$0xff]
  %v378 = vld [vmem:[%s1 + $0x368] sm:$0xff]
  %v379 = vld [vmem:[%s1 + $0x370] sm:$0xff]
  %v380 = vld [vmem:[%s1 + $0x378] sm:$0xff]
  %v381 = vld [vmem:[%s1 + $0x380] sm:$0xff]
  %v382 = vld [vmem:[%s1 + $0x388] sm:$0xff]
  %v383 = vld [vmem:[%s1 + $0x390] sm:$0xff]
  %v384 = vld [vmem:[%s1 + $0x398] sm:$0xff]
  %v385 = vld [vmem:[%s1 + $0x3a0] sm:$0xff]
  %v386 = vld [vmem:[%s1 + $0x3a8] sm:$0xff]
  %v387 = vld [vmem:[%s1 + $0x3b0] sm:$0xff]
  %v388 = vld [vmem:[%s1 + $0x3b8] sm:$0xff]
  %v389 = vld [vmem:[%s1 + $0x3c0] sm:$0xff]
  %v390 = vld [vmem:[%s1 + $0x3c8] sm:$0xff]
  %v391 = vld [vmem:[%s1 + $0x3d0] sm:$0xff]
  %v392 = vld [vmem:[%s1 + $0x3d8] sm:$0xff]
  %v393 = vld [vmem:[%s1 + $0x3e0] sm:$0xff]
  %v394 = vld [vmem:[%s1 + $0x3e8] sm:$0xff]
  %v395 = vld [vmem:[%s1 + $0x3f0] sm:$0xff]
  %v396 = vld [vmem:[%s1 + $0x3f8] sm:$0xff]
  %v397 = vld [vmem:[%s1 + $0x400] sm:$0xff]
  %v398 = vld [vmem:[%s1 + $0x408] sm:$0xff]
  %v399 = vld [vmem:[%s1 + $0x410] sm:$0xff]
  %v400 = vld [vmem:[%s1 + $0x418] sm:$0xff]
  %v401 = vld [vmem:[%s1 + $0x420] sm:$0xff]
  %v402 = vld [vmem:[%s1 + $0x428] sm:$0xff]
  %v403 = vld [vmem:[%s1 + $0x430] sm:$0xff]
  %v404 = vld [vmem:[%s1 + $0x438] sm:$0xff]
  %v405 = vld [vmem:[%s1 + $0x440] sm:$0xff]
  %v406 = vld [vmem:[%s1 + $0x448] sm:$0xff]
  %v407 = vld [vmem:[%s1 + $0x450] sm:$0xff]
  %v408 = vld [vmem:[%s1 + $0x458] sm:$0xff]
  %v409 = vld [vmem:[%s1 + $0x460] sm:$0xff]
  %v410 = vld [vmem:[%s1 + $0x468] sm:$0xff]
  %v411 = vld [vmem:[%s1 + $0x470] sm:$0xff]
  %v412 = vld [vmem:[%s1 + $0x478] sm:$0xff]
  %v413 = vld [vmem:[%s1 + $0x480] sm:$0xff]
  %v414 = vld [vmem:[%s1 + $0x488] sm:$0xff]
  %v415 = vld [vmem:[%s1 + $0x490] sm:$0xff]
  %v416 = vld [vmem:[%s1 + $0x498] sm:$0xff]
  %v417 = vld [vmem:[%s1 + $0x4a0] sm:$0xff]
  %v418 = vld [vmem:[%s1 + $0x4a8] sm:$0xff]
  %v419 = vld [vmem:[%s1 + $0x4b0] sm:$0xff]
  %v420 = vld [vmem:[%s1 + $0x4b8] sm:$0xff]
  %v421 = vld [vmem:[%s1 + $0x4c0] sm:$0xff]
  %v422 = vld [vmem:[%s1 + $0x4c8] sm:$0xff]
  %v423 = vld [vmem:[%s1 + $0x4d0] sm:$0xff]
  %v424 = vld [vmem:[%s1 + $0x4d8] sm:$0xff]
  %v425 = vld [vmem:[%s1 + $0x4e0] sm:$0xff]
  %v426 = vld [vmem:[%s1 + $0x4e8] sm:$0xff]
  %v427 = vld [vmem:[%s1 + $0x4f0] sm:$0xff]
  %v428 = vld [vmem:[%s1 + $0x4f8] sm:$0xff]
  %v429 = vld [vmem:[%s1 + $0x500] sm:$0xff]
  %v430 = vld [vmem:[%s1 + $0x508] sm:$0xff]
  %v431 = vld [vmem:[%s1 + $0x510] sm:$0xff]
  %v432 = vld [vmem:[%s1 + $0x518] sm:$0xff]
  %v433 = vld [vmem:[%s1 + $0x520] sm:$0xff]
  %v434 = vld [vmem:[%s1 + $0x528] sm:$0xff]
  %v435 = vld [vmem:[%s1 + $0x530] sm:$0xff]
  %v436 = vld [vmem:[%s1 + $0x538] sm:$0xff]
  %v437 = vld [vmem:[%s1 + $0x540] sm:$0xff]
  %v438 = vld [vmem:[%s1 + $0x548] sm:$0xff]
  %v439 = vld [vmem:[%s1 + $0x550] sm:$0xff]
  %v440 = vld [vmem:[%s1 + $0x558] sm:$0xff]
  %v441 = vld [vmem:[%s1 + $0x560] sm:$0xff]
  %v442 = vld [vmem:[%s1 + $0x568] sm:$0xff]
  %v443 = vld [vmem:[%s1 + $0x570] sm:$0xff]
  %v444 = vld [vmem:[%s1 + $0x578] sm:$0xff]
  %v445 = vld [vmem:[%s1 + $0x580] sm:$0xff]
  %v446 = vld [vmem:[%s1 + $0x588] sm:$0xff]
  %v447 = vld [vmem:[%s1 + $0x590] sm:$0xff]
  %v448 = vld [vmem:[%s1 + $0x598] sm:$0xff]
  %v449 = vld [vmem:[%s1 + $0x5a0] sm:$0xff]
  %v450 = vld [vmem:[%s1 + $0x5a8] sm:$0xff]
  %v451 = vld [vmem:[%s1 + $0x5b0] sm:$0xff]
  %v452 = vld [vmem:[%s1 + $0x5b8] sm:$0xff]
  %v453 = vld [vmem:[%s1 + $0x5c0] sm:$0xff]
  %v454 = vld [vmem:[%s1 + $0x5c8] sm:$0xff]
  %v455 = vld [vmem:[%s1 + $0x5d0] sm:$0xff]
  %v456 = vld [vmem:[%s1 + $0x5d8] sm:$0xff]
  %v457 = vld [vmem:[%s1 + $0x5e0] sm:$0xff]
  %v458 = vld [vmem:[%s1 + $0x5e8] sm:$0xff]
  %v459 = vld [vmem:[%s1 + $0x5f0] sm:$0xff]
  %v460 = vld [vmem:[%s1 + $0x5f8] sm:$0xff]
  %v461 = vld [vmem:[%s1 + $0x600] sm:$0xff]
  %v462 = vld [vmem:[%s1 + $0x608] sm:$0xff]
  %v463 = vld [vmem:[%s1 + $0x610] sm:$0xff]
  %v464 = vld [vmem:[%s1 + $0x618] sm:$0xff]
  %v465 = vld [vmem:[%s1 + $0x620] sm:$0xff]
  %v466 = vld [vmem:[%s1 + $0x628] sm:$0xff]
  %v467 = vld [vmem:[%s1 + $0x630] sm:$0xff]
  %v468 = vld [vmem:[%s1 + $0x638] sm:$0xff]
  %v469 = vld [vmem:[%s1 + $0x640] sm:$0xff]
  %v470 = vld [vmem:[%s1 + $0x648] sm:$0xff]
  %v471 = vld [vmem:[%s1 + $0x650] sm:$0xff]
  %v472 = vld [vmem:[%s1 + $0x658] sm:$0xff]
  %v473 = vld [vmem:[%s1 + $0x660] sm:$0xff]
  %v474 = vld [vmem:[%s1 + $0x668] sm:$0xff]
  %v475 = vld [vmem:[%s1 + $0x670] sm:$0xff]
  %v476 = vld [vmem:[%s1 + $0x678] sm:$0xff]
  %v477 = vld [vmem:[%s1 + $0x680] sm:$0xff]
  %v478 = vld [vmem:[%s1 + $0x688] sm:$0xff]
  %v479 = vld [vmem:[%s1 + $0x690] sm:$0xff]
  %v480 = vld [vmem:[%s1 + $0x698] sm:$0xff]
  %v481 = vld [vmem:[%s1 + $0x6a0] sm:$0xff]
  %v482 = vld [vmem:[%s1 + $0x6a8] sm:$0xff]
  %v483 = vld [vmem:[%s1 + $0x6b0] sm:$0xff]
  %v484 = vld [vmem:[%s1 + $0x6b8] sm:$0xff]
  %v485 = vld [vmem:[%s1 + $0x6c0] sm:$0xff]
  %v486 = vld [vmem:[%s1 + $0x6c8] sm:$0xff]
  %v487 = vld [vmem:[%s1 + $0x6d0] sm:$0xff]
  %v488 = vld [vmem:[%s1 + $0x6d8] sm:$0xff]
  %v489 = vld [vmem:[%s1 + $0x6e0] sm:$0xff]
  %v490 = vld [vmem:[%s1 + $0x6e8] sm:$0xff]
  %v491 = vld [vmem:[%s1 + $0x6f0] sm:$0xff]
  %v492 = vld [vmem:[%s1 + $0x6f8] sm:$0xff]
  %v493 = vld [vmem:[%s1 + $0x700] sm:$0xff]
  %v494 = vld [vmem:[%s1 + $0x708] sm:$0xff]
  %v495 = vld [vmem:[%s1 + $0x710] sm:$0xff]
  %v496 = vld [vmem:[%s1 + $0x718] sm:$0xff]
  %v497 = vld [vmem:[%s1 + $0x720] sm:$0xff]
  %v498 = vld [vmem:[%s1 + $0x728] sm:$0xff]
  %v499 = vld [vmem:[%s1 + $0x730] sm:$0xff]
  %v500 = vld [vmem:[%s1 + $0x738] sm:$0xff]
  %v501 = vld [vmem:[%s1 + $0x740] sm:$0xff]
  %v502 = vld [vmem:[%s1 + $0x748] sm:$0xff]
  %v503 = vld [vmem:[%s1 + $0x750] sm:$0xff]
  %v504 = vld [vmem:[%s1 + $0x758] sm:$0xff]
  %v505 = vld [vmem:[%s1 + $0x760] sm:$0xff]
  %v506 = vld [vmem:[%s1 + $0x768] sm:$0xff]
  %v507 = vld [vmem:[%s1 + $0x770] sm:$0xff]
  %v508 = vld [vmem:[%s1 + $0x778] sm:$0xff]
  %v509 = vld [vmem:[%s1 + $0x780] sm:$0xff]
  %v510 = vld [vmem:[%s1 + $0x788] sm:$0xff]
  %v511 = vld [vmem:[%s1 + $0x790] sm:$0xff]
  %v512 = vld [vmem:[%s1 + $0x798] sm:$0xff]
  %v513 = vld [vmem:[%s1 + $0x7a0] sm:$0xff]
  %v514 = vld [vmem:[%s1 + $0x7a8] sm:$0xff]
  %v515 = vld [vmem:[%s1 + $0x7b0] sm:$0xff]
  %v516 = vld [vmem:[%s1 + $0x7b8] sm:$0xff]
  %v517 = vld [vmem:[%s1 + $0x7c0] sm:$0xff]
  %v518 = vld [vmem:[%s1 + $0x7c8] sm:$0xff]
  %v519 = vld [vmem:[%s1 + $0x7d0] sm:$0xff]
  %v520 = vld [vmem:[%s1 + $0x7d8] sm:$0xff]
  %v521 = vld [vmem:[%s1 + $0x7e0] sm:$0xff]
  %v522 = vld [vmem:[%s1 + $0x7e8] sm:$0xff]
  %v523 = vld [vmem:[%s1 + $0x7f0] sm:$0xff]
  %v524 = vld [vmem:[%s1 + $0x7f8] sm:$0xff]
  %v525 = vld [vmem:[%s1 + $0x800] sm:$0xff]
  %v526 = vld [vmem:[%s1 + $0x808] sm:$0xff]
  %528 = vset.pattern.permute.xlu0 0
  %529 = vperm.xlu0 %528, %v269
  %v530 = vpop.permute.xlu0 %529
  %533 = vset.pattern.permute.xlu0 0
  %534 = vperm.xlu0 %533, %v270
  %v535 = vpop.permute.xlu0 %534
  %538 = vset.pattern.permute.xlu0 0
  %539 = vperm.xlu0 %538, %v271
  %v540 = vpop.permute.xlu0 %539
  %543 = vset.pattern.permute.xlu0 0
  %544 = vperm.xlu0 %543, %v272
  %v545 = vpop.permute.xlu0 %544
  %548 = vset.pattern.permute.xlu0 0
  %549 = vperm.xlu0 %548, %v273
  %v550 = vpop.permute.xlu0 %549
  %553 = vset.pattern.permute.xlu0 0
  %554 = vperm.xlu0 %553, %v274
  %v555 = vpop.permute.xlu0 %554
  %558 = vset.pattern.permute.xlu0 0
  %559 = vperm.xlu0 %558, %v275
  %v560 = vpop.permute.xlu0 %559
  %563 = vset.pattern.permute.xlu0 0
  %564 = vperm.xlu0 %563, %v276
  %v565 = vpop.permute.xlu0 %564
  %568 = vset.pattern.permute.xlu0 0
  %569 = vperm.xlu0 %568, %v277
  %v570 = vpop.permute.xlu0 %569
  %573 = vset.pattern.permute.xlu0 0
  %574 = vperm.xlu0 %573, %v278
  %v575 = vpop.permute.xlu0 %574
  %578 = vset.pattern.permute.xlu0 0
  %579 = vperm.xlu0 %578, %v279
  %v580 = vpop.permute.xlu0 %579
  %583 = vset.pattern.permute.xlu0 0
  %584 = vperm.xlu0 %583, %v280
  %v585 = vpop.permute.xlu0 %584
  %588 = vset.pattern.permute.xlu0 0
  %589 = vperm.xlu0 %588, %v281
  %v590 = vpop.permute.xlu0 %589
  %593 = vset.pattern.permute.xlu0 0
  %594 = vperm.xlu0 %593, %v282
  %v595 = vpop.permute.xlu0 %594
  %598 = vset.pattern.permute.xlu0 0
  %599 = vperm.xlu0 %598, %v283
  %v600 = vpop.permute.xlu0 %599
  %603 = vset.pattern.permute.xlu0 0
  %604 = vperm.xlu0 %603, %v284
  %v605 = vpop.permute.xlu0 %604
  %608 = vset.pattern.permute.xlu0 0
  %609 = vperm.xlu0 %608, %v285
  %v610 = vpop.permute.xlu0 %609
  %613 = vset.pattern.permute.xlu0 0
  %614 = vperm.xlu0 %613, %v286
  %v615 = vpop.permute.xlu0 %614
  %618 = vset.pattern.permute.xlu0 0
  %619 = vperm.xlu0 %618, %v287
  %v620 = vpop.permute.xlu0 %619
  %623 = vset.pattern.permute.xlu0 0
  %624 = vperm.xlu0 %623, %v288
  %v625 = vpop.permute.xlu0 %624
  %628 = vset.pattern.permute.xlu0 0
  %629 = vperm.xlu0 %628, %v289
  %v630 = vpop.permute.xlu0 %629
  %633 = vset.pattern.permute.xlu0 0
  %634 = vperm.xlu0 %633, %v290
  %v635 = vpop.permute.xlu0 %634
  %638 = vset.pattern.permute.xlu0 0
  %639 = vperm.xlu0 %638, %v291
  %v640 = vpop.permute.xlu0 %639
  %643 = vset.pattern.permute.xlu0 0
  %644 = vperm.xlu0 %643, %v292
  %v645 = vpop.permute.xlu0 %644
  %648 = vset.pattern.permute.xlu0 0
  %649 = vperm.xlu0 %648, %v293
  %v650 = vpop.permute.xlu0 %649
  %653 = vset.pattern.permute.xlu0 0
  %654 = vperm.xlu0 %653, %v294
  %v655 = vpop.permute.xlu0 %654
  %658 = vset.pattern.permute.xlu0 0
  %659 = vperm.xlu0 %658, %v295
  %v660 = vpop.permute.xlu0 %659
  %663 = vset.pattern.permute.xlu0 0
  %664 = vperm.xlu0 %663, %v296
  %v665 = vpop.permute.xlu0 %664
  %668 = vset.pattern.permute.xlu0 0
  %669 = vperm.xlu0 %668, %v297
  %v670 = vpop.permute.xlu0 %669
  %673 = vset.pattern.permute.xlu0 0
  %674 = vperm.xlu0 %673, %v298
  %v675 = vpop.permute.xlu0 %674
  %678 = vset.pattern.permute.xlu0 0
  %679 = vperm.xlu0 %678, %v299
  %v680 = vpop.permute.xlu0 %679
  %683 = vset.pattern.permute.xlu0 0
  %684 = vperm.xlu0 %683, %v300
  %v685 = vpop.permute.xlu0 %684
  %688 = vset.pattern.permute.xlu0 0
  %689 = vperm.xlu0 %688, %v301
  %v690 = vpop.permute.xlu0 %689
  %693 = vset.pattern.permute.xlu0 0
  %694 = vperm.xlu0 %693, %v302
  %v695 = vpop.permute.xlu0 %694
  %698 = vset.pattern.permute.xlu0 0
  %699 = vperm.xlu0 %698, %v303
  %v700 = vpop.permute.xlu0 %699
  %703 = vset.pattern.permute.xlu0 0
  %704 = vperm.xlu0 %703, %v304
  %v705 = vpop.permute.xlu0 %704
  %708 = vset.pattern.permute.xlu0 0
  %709 = vperm.xlu0 %708, %v305
  %v710 = vpop.permute.xlu0 %709
  %713 = vset.pattern.permute.xlu0 0
  %714 = vperm.xlu0 %713, %v306
  %v715 = vpop.permute.xlu0 %714
  %718 = vset.pattern.permute.xlu0 0
  %719 = vperm.xlu0 %718, %v307
  %v720 = vpop.permute.xlu0 %719
  %723 = vset.pattern.permute.xlu0 0
  %724 = vperm.xlu0 %723, %v308
  %v725 = vpop.permute.xlu0 %724
  %728 = vset.pattern.permute.xlu0 0
  %729 = vperm.xlu0 %728, %v309
  %v730 = vpop.permute.xlu0 %729
  %733 = vset.pattern.permute.xlu0 0
  %734 = vperm.xlu0 %733, %v310
  %v735 = vpop.permute.xlu0 %734
  %738 = vset.pattern.permute.xlu0 0
  %739 = vperm.xlu0 %738, %v311
  %v740 = vpop.permute.xlu0 %739
  %743 = vset.pattern.permute.xlu0 0
  %744 = vperm.xlu0 %743, %v312
  %v745 = vpop.permute.xlu0 %744
  %748 = vset.pattern.permute.xlu0 0
  %749 = vperm.xlu0 %748, %v313
  %v750 = vpop.permute.xlu0 %749
  %753 = vset.pattern.permute.xlu0 0
  %754 = vperm.xlu0 %753, %v314
  %v755 = vpop.permute.xlu0 %754
  %758 = vset.pattern.permute.xlu0 0
  %759 = vperm.xlu0 %758, %v315
  %v760 = vpop.permute.xlu0 %759
  %763 = vset.pattern.permute.xlu0 0
  %764 = vperm.xlu0 %763, %v316
  %v765 = vpop.permute.xlu0 %764
  %768 = vset.pattern.permute.xlu0 0
  %769 = vperm.xlu0 %768, %v317
  %v770 = vpop.permute.xlu0 %769
  %773 = vset.pattern.permute.xlu0 0
  %774 = vperm.xlu0 %773, %v318
  %v775 = vpop.permute.xlu0 %774
  %778 = vset.pattern.permute.xlu0 0
  %779 = vperm.xlu0 %778, %v319
  %v780 = vpop.permute.xlu0 %779
  %783 = vset.pattern.permute.xlu0 0
  %784 = vperm.xlu0 %783, %v320
  %v785 = vpop.permute.xlu0 %784
  %788 = vset.pattern.permute.xlu0 0
  %789 = vperm.xlu0 %788, %v321
  %v790 = vpop.permute.xlu0 %789
  %793 = vset.pattern.permute.xlu0 0
  %794 = vperm.xlu0 %793, %v322
  %v795 = vpop.permute.xlu0 %794
  %798 = vset.pattern.permute.xlu0 0
  %799 = vperm.xlu0 %798, %v323
  %v800 = vpop.permute.xlu0 %799
  %803 = vset.pattern.permute.xlu0 0
  %804 = vperm.xlu0 %803, %v324
  %v805 = vpop.permute.xlu0 %804
  %808 = vset.pattern.permute.xlu0 0
  %809 = vperm.xlu0 %808, %v325
  %v810 = vpop.permute.xlu0 %809
  %813 = vset.pattern.permute.xlu0 0
  %814 = vperm.xlu0 %813, %v326
  %v815 = vpop.permute.xlu0 %814
  %818 = vset.pattern.permute.xlu0 0
  %819 = vperm.xlu0 %818, %v327
  %v820 = vpop.permute.xlu0 %819
  %823 = vset.pattern.permute.xlu0 0
  %824 = vperm.xlu0 %823, %v328
  %v825 = vpop.permute.xlu0 %824
  %828 = vset.pattern.permute.xlu0 0
  %829 = vperm.xlu0 %828, %v329
  %v830 = vpop.permute.xlu0 %829
  %833 = vset.pattern.permute.xlu0 0
  %834 = vperm.xlu0 %833, %v330
  %v835 = vpop.permute.xlu0 %834
  %838 = vset.pattern.permute.xlu0 0
  %839 = vperm.xlu0 %838, %v331
  %v840 = vpop.permute.xlu0 %839
  %843 = vset.pattern.permute.xlu0 0
  %844 = vperm.xlu0 %843, %v332
  %v845 = vpop.permute.xlu0 %844
  %848 = vset.pattern.permute.xlu0 0
  %849 = vperm.xlu0 %848, %v333
  %v850 = vpop.permute.xlu0 %849
  %853 = vset.pattern.permute.xlu0 0
  %854 = vperm.xlu0 %853, %v334
  %v855 = vpop.permute.xlu0 %854
  %858 = vset.pattern.permute.xlu0 0
  %859 = vperm.xlu0 %858, %v335
  %v860 = vpop.permute.xlu0 %859
  %863 = vset.pattern.permute.xlu0 0
  %864 = vperm.xlu0 %863, %v336
  %v865 = vpop.permute.xlu0 %864
  %868 = vset.pattern.permute.xlu0 0
  %869 = vperm.xlu0 %868, %v337
  %v870 = vpop.permute.xlu0 %869
  %873 = vset.pattern.permute.xlu0 0
  %874 = vperm.xlu0 %873, %v338
  %v875 = vpop.permute.xlu0 %874
  %878 = vset.pattern.permute.xlu0 0
  %879 = vperm.xlu0 %878, %v339
  %v880 = vpop.permute.xlu0 %879
  %883 = vset.pattern.permute.xlu0 0
  %884 = vperm.xlu0 %883, %v340
  %v885 = vpop.permute.xlu0 %884
  %888 = vset.pattern.permute.xlu0 0
  %889 = vperm.xlu0 %888, %v341
  %v890 = vpop.permute.xlu0 %889
  %893 = vset.pattern.permute.xlu0 0
  %894 = vperm.xlu0 %893, %v342
  %v895 = vpop.permute.xlu0 %894
  %898 = vset.pattern.permute.xlu0 0
  %899 = vperm.xlu0 %898, %v343
  %v900 = vpop.permute.xlu0 %899
  %903 = vset.pattern.permute.xlu0 0
  %904 = vperm.xlu0 %903, %v344
  %v905 = vpop.permute.xlu0 %904
  %908 = vset.pattern.permute.xlu0 0
  %909 = vperm.xlu0 %908, %v345
  %v910 = vpop.permute.xlu0 %909
  %913 = vset.pattern.permute.xlu0 0
  %914 = vperm.xlu0 %913, %v346
  %v915 = vpop.permute.xlu0 %914
  %918 = vset.pattern.permute.xlu0 0
  %919 = vperm.xlu0 %918, %v347
  %v920 = vpop.permute.xlu0 %919
  %923 = vset.pattern.permute.xlu0 0
  %924 = vperm.xlu0 %923, %v348
  %v925 = vpop.permute.xlu0 %924
  %928 = vset.pattern.permute.xlu0 0
  %929 = vperm.xlu0 %928, %v349
  %v930 = vpop.permute.xlu0 %929
  %933 = vset.pattern.permute.xlu0 0
  %934 = vperm.xlu0 %933, %v350
  %v935 = vpop.permute.xlu0 %934
  %938 = vset.pattern.permute.xlu0 0
  %939 = vperm.xlu0 %938, %v351
  %v940 = vpop.permute.xlu0 %939
  %943 = vset.pattern.permute.xlu0 0
  %944 = vperm.xlu0 %943, %v352
  %v945 = vpop.permute.xlu0 %944
  %948 = vset.pattern.permute.xlu0 0
  %949 = vperm.xlu0 %948, %v353
  %v950 = vpop.permute.xlu0 %949
  %953 = vset.pattern.permute.xlu0 0
  %954 = vperm.xlu0 %953, %v354
  %v955 = vpop.permute.xlu0 %954
  %958 = vset.pattern.permute.xlu0 0
  %959 = vperm.xlu0 %958, %v355
  %v960 = vpop.permute.xlu0 %959
  %963 = vset.pattern.permute.xlu0 0
  %964 = vperm.xlu0 %963, %v356
  %v965 = vpop.permute.xlu0 %964
  %968 = vset.pattern.permute.xlu0 0
  %969 = vperm.xlu0 %968, %v357
  %v970 = vpop.permute.xlu0 %969
  %973 = vset.pattern.permute.xlu0 0
  %974 = vperm.xlu0 %973, %v358
  %v975 = vpop.permute.xlu0 %974
  %978 = vset.pattern.permute.xlu0 0
  %979 = vperm.xlu0 %978, %v359
  %v980 = vpop.permute.xlu0 %979
  %983 = vset.pattern.permute.xlu0 0
  %984 = vperm.xlu0 %983, %v360
  %v985 = vpop.permute.xlu0 %984
  %988 = vset.pattern.permute.xlu0 0
  %989 = vperm.xlu0 %988, %v361
  %v990 = vpop.permute.xlu0 %989
  %993 = vset.pattern.permute.xlu0 0
  %994 = vperm.xlu0 %993, %v362
  %v995 = vpop.permute.xlu0 %994
  %998 = vset.pattern.permute.xlu0 0
  %999 = vperm.xlu0 %998, %v363
  %v1000 = vpop.permute.xlu0 %999
  %1003 = vset.pattern.permute.xlu0 0
  %1004 = vperm.xlu0 %1003, %v364
  %v1005 = vpop.permute.xlu0 %1004
  %1008 = vset.pattern.permute.xlu0 0
  %1009 = vperm.xlu0 %1008, %v365
  %v1010 = vpop.permute.xlu0 %1009
  %1013 = vset.pattern.permute.xlu0 0
  %1014 = vperm.xlu0 %1013, %v366
  %v1015 = vpop.permute.xlu0 %1014
  %1018 = vset.pattern.permute.xlu0 0
  %1019 = vperm.xlu0 %1018, %v367
  %v1020 = vpop.permute.xlu0 %1019
  %1023 = vset.pattern.permute.xlu0 0
  %1024 = vperm.xlu0 %1023, %v368
  %v1025 = vpop.permute.xlu0 %1024
  %1028 = vset.pattern.permute.xlu0 0
  %1029 = vperm.xlu0 %1028, %v369
  %v1030 = vpop.permute.xlu0 %1029
  %1033 = vset.pattern.permute.xlu0 0
  %1034 = vperm.xlu0 %1033, %v370
  %v1035 = vpop.permute.xlu0 %1034
  %1038 = vset.pattern.permute.xlu0 0
  %1039 = vperm.xlu0 %1038, %v371
  %v1040 = vpop.permute.xlu0 %1039
  %1043 = vset.pattern.permute.xlu0 0
  %1044 = vperm.xlu0 %1043, %v372
  %v1045 = vpop.permute.xlu0 %1044
  %1048 = vset.pattern.permute.xlu0 0
  %1049 = vperm.xlu0 %1048, %v373
  %v1050 = vpop.permute.xlu0 %1049
  %1053 = vset.pattern.permute.xlu0 0
  %1054 = vperm.xlu0 %1053, %v374
  %v1055 = vpop.permute.xlu0 %1054
  %1058 = vset.pattern.permute.xlu0 0
  %1059 = vperm.xlu0 %1058, %v375
  %v1060 = vpop.permute.xlu0 %1059
  %1063 = vset.pattern.permute.xlu0 0
  %1064 = vperm.xlu0 %1063, %v376
  %v1065 = vpop.permute.xlu0 %1064
  %1068 = vset.pattern.permute.xlu0 0
  %1069 = vperm.xlu0 %1068, %v377
  %v1070 = vpop.permute.xlu0 %1069
  %1073 = vset.pattern.permute.xlu0 0
  %1074 = vperm.xlu0 %1073, %v378
  %v1075 = vpop.permute.xlu0 %1074
  %1078 = vset.pattern.permute.xlu0 0
  %1079 = vperm.xlu0 %1078, %v379
  %v1080 = vpop.permute.xlu0 %1079
  %1083 = vset.pattern.permute.xlu0 0
  %1084 = vperm.xlu0 %1083, %v380
  %v1085 = vpop.permute.xlu0 %1084
  %1088 = vset.pattern.permute.xlu0 0
  %1089 = vperm.xlu0 %1088, %v381
  %v1090 = vpop.permute.xlu0 %1089
  %1093 = vset.pattern.permute.xlu0 0
  %1094 = vperm.xlu0 %1093, %v382
  %v1095 = vpop.permute.xlu0 %1094
  %1098 = vset.pattern.permute.xlu0 0
  %1099 = vperm.xlu0 %1098, %v383
  %v1100 = vpop.permute.xlu0 %1099
  %1103 = vset.pattern.permute.xlu0 0
  %1104 = vperm.xlu0 %1103, %v384
  %v1105 = vpop.permute.xlu0 %1104
  %1108 = vset.pattern.permute.xlu0 0
  %1109 = vperm.xlu0 %1108, %v385
  %v1110 = vpop.permute.xlu0 %1109
  %1113 = vset.pattern.permute.xlu0 0
  %1114 = vperm.xlu0 %1113, %v386
  %v1115 = vpop.permute.xlu0 %1114
  %1118 = vset.pattern.permute.xlu0 0
  %1119 = vperm.xlu0 %1118, %v387
  %v1120 = vpop.permute.xlu0 %1119
  %1123 = vset.pattern.permute.xlu0 0
  %1124 = vperm.xlu0 %1123, %v388
  %v1125 = vpop.permute.xlu0 %1124
  %1128 = vset.pattern.permute.xlu0 0
  %1129 = vperm.xlu0 %1128, %v389
  %v1130 = vpop.permute.xlu0 %1129
  %1133 = vset.pattern.permute.xlu0 0
  %1134 = vperm.xlu0 %1133, %v390
  %v1135 = vpop.permute.xlu0 %1134
  %1138 = vset.pattern.permute.xlu0 0
  %1139 = vperm.xlu0 %1138, %v391
  %v1140 = vpop.permute.xlu0 %1139
  %1143 = vset.pattern.permute.xlu0 0
  %1144 = vperm.xlu0 %1143, %v392
  %v1145 = vpop.permute.xlu0 %1144
  %1148 = vset.pattern.permute.xlu0 0
  %1149 = vperm.xlu0 %1148, %v393
  %v1150 = vpop.permute.xlu0 %1149
  %1153 = vset.pattern.permute.xlu0 0
  %1154 = vperm.xlu0 %1153, %v394
  %v1155 = vpop.permute.xlu0 %1154
  %1158 = vset.pattern.permute.xlu0 0
  %1159 = vperm.xlu0 %1158, %v395
  %v1160 = vpop.permute.xlu0 %1159
  %1163 = vset.pattern.permute.xlu0 0
  %1164 = vperm.xlu0 %1163, %v396
  %v1165 = vpop.permute.xlu0 %1164
  %1168 = vset.pattern.permute.xlu0 0
  %1169 = vperm.xlu0 %1168, %v397
  %v1170 = vpop.permute.xlu0 %1169
  %1173 = vset.pattern.permute.xlu0 0
  %1174 = vperm.xlu0 %1173, %v398
  %v1175 = vpop.permute.xlu0 %1174
  %1178 = vset.pattern.permute.xlu0 0
  %1179 = vperm.xlu0 %1178, %v399
  %v1180 = vpop.permute.xlu0 %1179
  %1183 = vset.pattern.permute.xlu0 0
  %1184 = vperm.xlu0 %1183, %v400
  %v1185 = vpop.permute.xlu0 %1184
  %1188 = vset.pattern.permute.xlu0 0
  %1189 = vperm.xlu0 %1188, %v401
  %v1190 = vpop.permute.xlu0 %1189
  %1193 = vset.pattern.permute.xlu0 0
  %1194 = vperm.xlu0 %1193, %v402
  %v1195 = vpop.permute.xlu0 %1194
  %1198 = vset.pattern.permute.xlu0 0
  %1199 = vperm.xlu0 %1198, %v403
  %v1200 = vpop.permute.xlu0 %1199
  %1203 = vset.pattern.permute.xlu0 0
  %1204 = vperm.xlu0 %1203, %v404
  %v1205 = vpop.permute.xlu0 %1204
  %1208 = vset.pattern.permute.xlu0 0
  %1209 = vperm.xlu0 %1208, %v405
  %v1210 = vpop.permute.xlu0 %1209
  %1213 = vset.pattern.permute.xlu0 0
  %1214 = vperm.xlu0 %1213, %v406
  %v1215 = vpop.permute.xlu0 %1214
  %1218 = vset.pattern.permute.xlu0 0
  %1219 = vperm.xlu0 %1218, %v407
  %v1220 = vpop.permute.xlu0 %1219
  %1223 = vset.pattern.permute.xlu0 0
  %1224 = vperm.xlu0 %1223, %v408
  %v1225 = vpop.permute.xlu0 %1224
  %1228 = vset.pattern.permute.xlu0 0
  %1229 = vperm.xlu0 %1228, %v409
  %v1230 = vpop.permute.xlu0 %1229
  %1233 = vset.pattern.permute.xlu0 0
  %1234 = vperm.xlu0 %1233, %v410
  %v1235 = vpop.permute.xlu0 %1234
  %1238 = vset.pattern.permute.xlu0 0
  %1239 = vperm.xlu0 %1238, %v411
  %v1240 = vpop.permute.xlu0 %1239
  %1243 = vset.pattern.permute.xlu0 0
  %1244 = vperm.xlu0 %1243, %v412
  %v1245 = vpop.permute.xlu0 %1244
  %1248 = vset.pattern.permute.xlu0 0
  %1249 = vperm.xlu0 %1248, %v413
  %v1250 = vpop.permute.xlu0 %1249
  %1253 = vset.pattern.permute.xlu0 0
  %1254 = vperm.xlu0 %1253, %v414
  %v1255 = vpop.permute.xlu0 %1254
  %1258 = vset.pattern.permute.xlu0 0
  %1259 = vperm.xlu0 %1258, %v415
  %v1260 = vpop.permute.xlu0 %1259
  %1263 = vset.pattern.permute.xlu0 0
  %1264 = vperm.xlu0 %1263, %v416
  %v1265 = vpop.permute.xlu0 %1264
  %1268 = vset.pattern.permute.xlu0 0
  %1269 = vperm.xlu0 %1268, %v417
  %v1270 = vpop.permute.xlu0 %1269
  %1273 = vset.pattern.permute.xlu0 0
  %1274 = vperm.xlu0 %1273, %v418
  %v1275 = vpop.permute.xlu0 %1274
  %1278 = vset.pattern.permute.xlu0 0
  %1279 = vperm.xlu0 %1278, %v419
  %v1280 = vpop.permute.xlu0 %1279
  %1283 = vset.pattern.permute.xlu0 0
  %1284 = vperm.xlu0 %1283, %v420
  %v1285 = vpop.permute.xlu0 %1284
  %1288 = vset.pattern.permute.xlu0 0
  %1289 = vperm.xlu0 %1288, %v421
  %v1290 = vpop.permute.xlu0 %1289
  %1293 = vset.pattern.permute.xlu0 0
  %1294 = vperm.xlu0 %1293, %v422
  %v1295 = vpop.permute.xlu0 %1294
  %1298 = vset.pattern.permute.xlu0 0
  %1299 = vperm.xlu0 %1298, %v423
  %v1300 = vpop.permute.xlu0 %1299
  %1303 = vset.pattern.permute.xlu0 0
  %1304 = vperm.xlu0 %1303, %v424
  %v1305 = vpop.permute.xlu0 %1304
  %1308 = vset.pattern.permute.xlu0 0
  %1309 = vperm.xlu0 %1308, %v425
  %v1310 = vpop.permute.xlu0 %1309
  %1313 = vset.pattern.permute.xlu0 0
  %1314 = vperm.xlu0 %1313, %v426
  %v1315 = vpop.permute.xlu0 %1314
  %1318 = vset.pattern.permute.xlu0 0
  %1319 = vperm.xlu0 %1318, %v427
  %v1320 = vpop.permute.xlu0 %1319
  %1323 = vset.pattern.permute.xlu0 0
  %1324 = vperm.xlu0 %1323, %v428
  %v1325 = vpop.permute.xlu0 %1324
  %1328 = vset.pattern.permute.xlu0 0
  %1329 = vperm.xlu0 %1328, %v429
  %v1330 = vpop.permute.xlu0 %1329
  %1333 = vset.pattern.permute.xlu0 0
  %1334 = vperm.xlu0 %1333, %v430
  %v1335 = vpop.permute.xlu0 %1334
  %1338 = vset.pattern.permute.xlu0 0
  %1339 = vperm.xlu0 %1338, %v431
  %v1340 = vpop.permute.xlu0 %1339
  %1343 = vset.pattern.permute.xlu0 0
  %1344 = vperm.xlu0 %1343, %v432
  %v1345 = vpop.permute.xlu0 %1344
  %1348 = vset.pattern.permute.xlu0 0
  %1349 = vperm.xlu0 %1348, %v433
  %v1350 = vpop.permute.xlu0 %1349
  %1353 = vset.pattern.permute.xlu0 0
  %1354 = vperm.xlu0 %1353, %v434
  %v1355 = vpop.permute.xlu0 %1354
  %1358 = vset.pattern.permute.xlu0 0
  %1359 = vperm.xlu0 %1358, %v435
  %v1360 = vpop.permute.xlu0 %1359
  %1363 = vset.pattern.permute.xlu0 0
  %1364 = vperm.xlu0 %1363, %v436
  %v1365 = vpop.permute.xlu0 %1364
  %1368 = vset.pattern.permute.xlu0 0
  %1369 = vperm.xlu0 %1368, %v437
  %v1370 = vpop.permute.xlu0 %1369
  %1373 = vset.pattern.permute.xlu0 0
  %1374 = vperm.xlu0 %1373, %v438
  %v1375 = vpop.permute.xlu0 %1374
  %1378 = vset.pattern.permute.xlu0 0
  %1379 = vperm.xlu0 %1378, %v439
  %v1380 = vpop.permute.xlu0 %1379
  %1383 = vset.pattern.permute.xlu0 0
  %1384 = vperm.xlu0 %1383, %v440
  %v1385 = vpop.permute.xlu0 %1384
  %1388 = vset.pattern.permute.xlu0 0
  %1389 = vperm.xlu0 %1388, %v441
  %v1390 = vpop.permute.xlu0 %1389
  %1393 = vset.pattern.permute.xlu0 0
  %1394 = vperm.xlu0 %1393, %v442
  %v1395 = vpop.permute.xlu0 %1394
  %1398 = vset.pattern.permute.xlu0 0
  %1399 = vperm.xlu0 %1398, %v443
  %v1400 = vpop.permute.xlu0 %1399
  %1403 = vset.pattern.permute.xlu0 0
  %1404 = vperm.xlu0 %1403, %v444
  %v1405 = vpop.permute.xlu0 %1404
  %1408 = vset.pattern.permute.xlu0 0
  %1409 = vperm.xlu0 %1408, %v445
  %v1410 = vpop.permute.xlu0 %1409
  %1413 = vset.pattern.permute.xlu0 0
  %1414 = vperm.xlu0 %1413, %v446
  %v1415 = vpop.permute.xlu0 %1414
  %1418 = vset.pattern.permute.xlu0 0
  %1419 = vperm.xlu0 %1418, %v447
  %v1420 = vpop.permute.xlu0 %1419
  %1423 = vset.pattern.permute.xlu0 0
  %1424 = vperm.xlu0 %1423, %v448
  %v1425 = vpop.permute.xlu0 %1424
  %1428 = vset.pattern.permute.xlu0 0
  %1429 = vperm.xlu0 %1428, %v449
  %v1430 = vpop.permute.xlu0 %1429
  %1433 = vset.pattern.permute.xlu0 0
  %1434 = vperm.xlu0 %1433, %v450
  %v1435 = vpop.permute.xlu0 %1434
  %1438 = vset.pattern.permute.xlu0 0
  %1439 = vperm.xlu0 %1438, %v451
  %v1440 = vpop.permute.xlu0 %1439
  %1443 = vset.pattern.permute.xlu0 0
  %1444 = vperm.xlu0 %1443, %v452
  %v1445 = vpop.permute.xlu0 %1444
  %1448 = vset.pattern.permute.xlu0 0
  %1449 = vperm.xlu0 %1448, %v453
  %v1450 = vpop.permute.xlu0 %1449
  %1453 = vset.pattern.permute.xlu0 0
  %1454 = vperm.xlu0 %1453, %v454
  %v1455 = vpop.permute.xlu0 %1454
  %1458 = vset.pattern.permute.xlu0 0
  %1459 = vperm.xlu0 %1458, %v455
  %v1460 = vpop.permute.xlu0 %1459
  %1463 = vset.pattern.permute.xlu0 0
  %1464 = vperm.xlu0 %1463, %v456
  %v1465 = vpop.permute.xlu0 %1464
  %1468 = vset.pattern.permute.xlu0 0
  %1469 = vperm.xlu0 %1468, %v457
  %v1470 = vpop.permute.xlu0 %1469
  %1473 = vset.pattern.permute.xlu0 0
  %1474 = vperm.xlu0 %1473, %v458
  %v1475 = vpop.permute.xlu0 %1474
  %1478 = vset.pattern.permute.xlu0 0
  %1479 = vperm.xlu0 %1478, %v459
  %v1480 = vpop.permute.xlu0 %1479
  %1483 = vset.pattern.permute.xlu0 0
  %1484 = vperm.xlu0 %1483, %v460
  %v1485 = vpop.permute.xlu0 %1484
  %1488 = vset.pattern.permute.xlu0 0
  %1489 = vperm.xlu0 %1488, %v461
  %v1490 = vpop.permute.xlu0 %1489
  %1493 = vset.pattern.permute.xlu0 0
  %1494 = vperm.xlu0 %1493, %v462
  %v1495 = vpop.permute.xlu0 %1494
  %1498 = vset.pattern.permute.xlu0 0
  %1499 = vperm.xlu0 %1498, %v463
  %v1500 = vpop.permute.xlu0 %1499
  %1503 = vset.pattern.permute.xlu0 0
  %1504 = vperm.xlu0 %1503, %v464
  %v1505 = vpop.permute.xlu0 %1504
  %1508 = vset.pattern.permute.xlu0 0
  %1509 = vperm.xlu0 %1508, %v465
  %v1510 = vpop.permute.xlu0 %1509
  %1513 = vset.pattern.permute.xlu0 0
  %1514 = vperm.xlu0 %1513, %v466
  %v1515 = vpop.permute.xlu0 %1514
  %1518 = vset.pattern.permute.xlu0 0
  %1519 = vperm.xlu0 %1518, %v467
  %v1520 = vpop.permute.xlu0 %1519
  %1523 = vset.pattern.permute.xlu0 0
  %1524 = vperm.xlu0 %1523, %v468
  %v1525 = vpop.permute.xlu0 %1524
  %1528 = vset.pattern.permute.xlu0 0
  %1529 = vperm.xlu0 %1528, %v469
  %v1530 = vpop.permute.xlu0 %1529
  %1533 = vset.pattern.permute.xlu0 0
  %1534 = vperm.xlu0 %1533, %v470
  %v1535 = vpop.permute.xlu0 %1534
  %1538 = vset.pattern.permute.xlu0 0
  %1539 = vperm.xlu0 %1538, %v471
  %v1540 = vpop.permute.xlu0 %1539
  %1543 = vset.pattern.permute.xlu0 0
  %1544 = vperm.xlu0 %1543, %v472
  %v1545 = vpop.permute.xlu0 %1544
  %1548 = vset.pattern.permute.xlu0 0
  %1549 = vperm.xlu0 %1548, %v473
  %v1550 = vpop.permute.xlu0 %1549
  %1553 = vset.pattern.permute.xlu0 0
  %1554 = vperm.xlu0 %1553, %v474
  %v1555 = vpop.permute.xlu0 %1554
  %1558 = vset.pattern.permute.xlu0 0
  %1559 = vperm.xlu0 %1558, %v475
  %v1560 = vpop.permute.xlu0 %1559
  %1563 = vset.pattern.permute.xlu0 0
  %1564 = vperm.xlu0 %1563, %v476
  %v1565 = vpop.permute.xlu0 %1564
  %1568 = vset.pattern.permute.xlu0 0
  %1569 = vperm.xlu0 %1568, %v477
  %v1570 = vpop.permute.xlu0 %1569
  %1573 = vset.pattern.permute.xlu0 0
  %1574 = vperm.xlu0 %1573, %v478
  %v1575 = vpop.permute.xlu0 %1574
  %1578 = vset.pattern.permute.xlu0 0
  %1579 = vperm.xlu0 %1578, %v479
  %v1580 = vpop.permute.xlu0 %1579
  %1583 = vset.pattern.permute.xlu0 0
  %1584 = vperm.xlu0 %1583, %v480
  %v1585 = vpop.permute.xlu0 %1584
  %1588 = vset.pattern.permute.xlu0 0
  %1589 = vperm.xlu0 %1588, %v481
  %v1590 = vpop.permute.xlu0 %1589
  %1593 = vset.pattern.permute.xlu0 0
  %1594 = vperm.xlu0 %1593, %v482
  %v1595 = vpop.permute.xlu0 %1594
  %1598 = vset.pattern.permute.xlu0 0
  %1599 = vperm.xlu0 %1598, %v483
  %v1600 = vpop.permute.xlu0 %1599
  %1603 = vset.pattern.permute.xlu0 0
  %1604 = vperm.xlu0 %1603, %v484
  %v1605 = vpop.permute.xlu0 %1604
  %1608 = vset.pattern.permute.xlu0 0
  %1609 = vperm.xlu0 %1608, %v485
  %v1610 = vpop.permute.xlu0 %1609
  %1613 = vset.pattern.permute.xlu0 0
  %1614 = vperm.xlu0 %1613, %v486
  %v1615 = vpop.permute.xlu0 %1614
  %1618 = vset.pattern.permute.xlu0 0
  %1619 = vperm.xlu0 %1618, %v487
  %v1620 = vpop.permute.xlu0 %1619
  %1623 = vset.pattern.permute.xlu0 0
  %1624 = vperm.xlu0 %1623, %v488
  %v1625 = vpop.permute.xlu0 %1624
  %1628 = vset.pattern.permute.xlu0 0
  %1629 = vperm.xlu0 %1628, %v489
  %v1630 = vpop.permute.xlu0 %1629
  %1633 = vset.pattern.permute.xlu0 0
  %1634 = vperm.xlu0 %1633, %v490
  %v1635 = vpop.permute.xlu0 %1634
  %1638 = vset.pattern.permute.xlu0 0
  %1639 = vperm.xlu0 %1638, %v491
  %v1640 = vpop.permute.xlu0 %1639
  %1643 = vset.pattern.permute.xlu0 0
  %1644 = vperm.xlu0 %1643, %v492
  %v1645 = vpop.permute.xlu0 %1644
  %1648 = vset.pattern.permute.xlu0 0
  %1649 = vperm.xlu0 %1648, %v493
  %v1650 = vpop.permute.xlu0 %1649
  %1653 = vset.pattern.permute.xlu0 0
  %1654 = vperm.xlu0 %1653, %v494
  %v1655 = vpop.permute.xlu0 %1654
  %1658 = vset.pattern.permute.xlu0 0
  %1659 = vperm.xlu0 %1658, %v495
  %v1660 = vpop.permute.xlu0 %1659
  %1663 = vset.pattern.permute.xlu0 0
  %1664 = vperm.xlu0 %1663, %v496
  %v1665 = vpop.permute.xlu0 %1664
  %1668 = vset.pattern.permute.xlu0 0
  %1669 = vperm.xlu0 %1668, %v497
  %v1670 = vpop.permute.xlu0 %1669
  %1673 = vset.pattern.permute.xlu0 0
  %1674 = vperm.xlu0 %1673, %v498
  %v1675 = vpop.permute.xlu0 %1674
  %1678 = vset.pattern.permute.xlu0 0
  %1679 = vperm.xlu0 %1678, %v499
  %v1680 = vpop.permute.xlu0 %1679
  %1683 = vset.pattern.permute.xlu0 0
  %1684 = vperm.xlu0 %1683, %v500
  %v1685 = vpop.permute.xlu0 %1684
  %1688 = vset.pattern.permute.xlu0 0
  %1689 = vperm.xlu0 %1688, %v501
  %v1690 = vpop.permute.xlu0 %1689
  %1693 = vset.pattern.permute.xlu0 0
  %1694 = vperm.xlu0 %1693, %v502
  %v1695 = vpop.permute.xlu0 %1694
  %1698 = vset.pattern.permute.xlu0 0
  %1699 = vperm.xlu0 %1698, %v503
  %v1700 = vpop.permute.xlu0 %1699
  %1703 = vset.pattern.permute.xlu0 0
  %1704 = vperm.xlu0 %1703, %v504
  %v1705 = vpop.permute.xlu0 %1704
  %1708 = vset.pattern.permute.xlu0 0
  %1709 = vperm.xlu0 %1708, %v505
  %v1710 = vpop.permute.xlu0 %1709
  %1713 = vset.pattern.permute.xlu0 0
  %1714 = vperm.xlu0 %1713, %v506
  %v1715 = vpop.permute.xlu0 %1714
  %1718 = vset.pattern.permute.xlu0 0
  %1719 = vperm.xlu0 %1718, %v507
  %v1720 = vpop.permute.xlu0 %1719
  %1723 = vset.pattern.permute.xlu0 0
  %1724 = vperm.xlu0 %1723, %v508
  %v1725 = vpop.permute.xlu0 %1724
  %1728 = vset.pattern.permute.xlu0 0
  %1729 = vperm.xlu0 %1728, %v509
  %v1730 = vpop.permute.xlu0 %1729
  %1733 = vset.pattern.permute.xlu0 0
  %1734 = vperm.xlu0 %1733, %v510
  %v1735 = vpop.permute.xlu0 %1734
  %1738 = vset.pattern.permute.xlu0 0
  %1739 = vperm.xlu0 %1738, %v511
  %v1740 = vpop.permute.xlu0 %1739
  %1743 = vset.pattern.permute.xlu0 0
  %1744 = vperm.xlu0 %1743, %v512
  %v1745 = vpop.permute.xlu0 %1744
  %1748 = vset.pattern.permute.xlu0 0
  %1749 = vperm.xlu0 %1748, %v513
  %v1750 = vpop.permute.xlu0 %1749
  %1753 = vset.pattern.permute.xlu0 0
  %1754 = vperm.xlu0 %1753, %v514
  %v1755 = vpop.permute.xlu0 %1754
  %1758 = vset.pattern.permute.xlu0 0
  %1759 = vperm.xlu0 %1758, %v515
  %v1760 = vpop.permute.xlu0 %1759
  %1763 = vset.pattern.permute.xlu0 0
  %1764 = vperm.xlu0 %1763, %v516
  %v1765 = vpop.permute.xlu0 %1764
  %1768 = vset.pattern.permute.xlu0 0
  %1769 = vperm.xlu0 %1768, %v517
  %v1770 = vpop.permute.xlu0 %1769
  %1773 = vset.pattern.permute.xlu0 0
  %1774 = vperm.xlu0 %1773, %v518
  %v1775 = vpop.permute.xlu0 %1774
  %1778 = vset.pattern.permute.xlu0 0
  %1779 = vperm.xlu0 %1778, %v519
  %v1780 = vpop.permute.xlu0 %1779
  %1783 = vset.pattern.permute.xlu0 0
  %1784 = vperm.xlu0 %1783, %v520
  %v1785 = vpop.permute.xlu0 %1784
  %1788 = vset.pattern.permute.xlu0 0
  %1789 = vperm.xlu0 %1788, %v521
  %v1790 = vpop.permute.xlu0 %1789
  %1793 = vset.pattern.permute.xlu0 0
  %1794 = vperm.xlu0 %1793, %v522
  %v1795 = vpop.permute.xlu0 %1794
  %1798 = vset.pattern.permute.xlu0 0
  %1799 = vperm.xlu0 %1798, %v523
  %v1800 = vpop.permute.xlu0 %1799
  %1803 = vset.pattern.permute.xlu0 0
  %1804 = vperm.xlu0 %1803, %v524
  %v1805 = vpop.permute.xlu0 %1804
  %1808 = vset.pattern.permute.xlu0 0
  %1809 = vperm.xlu0 %1808, %v525
  %v1810 = vpop.permute.xlu0 %1809
  %1813 = vset.pattern.permute.xlu0 0
  %1814 = vperm.xlu0 %1813, %v526
  %v1815 = vpop.permute.xlu0 %1814
  %v1817 = vmul.f32 %v11, %v530
  %v1818 = vmul.f32 %v12, %v535
  %v1819 = vmul.f32 %v13, %v540
  %v1820 = vmul.f32 %v14, %v545
  %v1821 = vmul.f32 %v15, %v550
  %v1822 = vmul.f32 %v16, %v555
  %v1823 = vmul.f32 %v17, %v560
  %v1824 = vmul.f32 %v18, %v565
  %v1825 = vmul.f32 %v19, %v570
  %v1826 = vmul.f32 %v20, %v575
  %v1827 = vmul.f32 %v21, %v580
  %v1828 = vmul.f32 %v22, %v585
  %v1829 = vmul.f32 %v23, %v590
  %v1830 = vmul.f32 %v24, %v595
  %v1831 = vmul.f32 %v25, %v600
  %v1832 = vmul.f32 %v26, %v605
  %v1833 = vmul.f32 %v27, %v610
  %v1834 = vmul.f32 %v28, %v615
  %v1835 = vmul.f32 %v29, %v620
  %v1836 = vmul.f32 %v30, %v625
  %v1837 = vmul.f32 %v31, %v630
  %v1838 = vmul.f32 %v32, %v635
  %v1839 = vmul.f32 %v33, %v640
  %v1840 = vmul.f32 %v34, %v645
  %v1841 = vmul.f32 %v35, %v650
  %v1842 = vmul.f32 %v36, %v655
  %v1843 = vmul.f32 %v37, %v660
  %v1844 = vmul.f32 %v38, %v665
  %v1845 = vmul.f32 %v39, %v670
  %v1846 = vmul.f32 %v40, %v675
  %v1847 = vmul.f32 %v41, %v680
  %v1848 = vmul.f32 %v42, %v685
  %v1849 = vmul.f32 %v43, %v690
  %v1850 = vmul.f32 %v44, %v695
  %v1851 = vmul.f32 %v45, %v700
  %v1852 = vmul.f32 %v46, %v705
  %v1853 = vmul.f32 %v47, %v710
  %v1854 = vmul.f32 %v48, %v715
  %v1855 = vmul.f32 %v49, %v720
  %v1856 = vmul.f32 %v50, %v725
  %v1857 = vmul.f32 %v51, %v730
  %v1858 = vmul.f32 %v52, %v735
  %v1859 = vmul.f32 %v53, %v740
  %v1860 = vmul.f32 %v54, %v745
  %v1861 = vmul.f32 %v55, %v750
  %v1862 = vmul.f32 %v56, %v755
  %v1863 = vmul.f32 %v57, %v760
  %v1864 = vmul.f32 %v58, %v765
  %v1865 = vmul.f32 %v59, %v770
  %v1866 = vmul.f32 %v60, %v775
  %v1867 = vmul.f32 %v61, %v780
  %v1868 = vmul.f32 %v62, %v785
  %v1869 = vmul.f32 %v63, %v790
  %v1870 = vmul.f32 %v64, %v795
  %v1871 = vmul.f32 %v65, %v800
  %v1872 = vmul.f32 %v66, %v805
  %v1873 = vmul.f32 %v67, %v810
  %v1874 = vmul.f32 %v68, %v815
  %v1875 = vmul.f32 %v69, %v820
  %v1876 = vmul.f32 %v70, %v825
  %v1877 = vmul.f32 %v71, %v830
  %v1878 = vmul.f32 %v72, %v835
  %v1879 = vmul.f32 %v73, %v840
  %v1880 = vmul.f32 %v74, %v845
  %v1881 = vmul.f32 %v75, %v850
  %v1882 = vmul.f32 %v76, %v855
  %v1883 = vmul.f32 %v77, %v860
  %v1884 = vmul.f32 %v78, %v865
  %v1885 = vmul.f32 %v79, %v870
  %v1886 = vmul.f32 %v80, %v875
  %v1887 = vmul.f32 %v81, %v880
  %v1888 = vmul.f32 %v82, %v885
  %v1889 = vmul.f32 %v83, %v890
  %v1890 = vmul.f32 %v84, %v895
  %v1891 = vmul.f32 %v85, %v900
  %v1892 = vmul.f32 %v86, %v905
  %v1893 = vmul.f32 %v87, %v910
  %v1894 = vmul.f32 %v88, %v915
  %v1895 = vmul.f32 %v89, %v920
  %v1896 = vmul.f32 %v90, %v925
  %v1897 = vmul.f32 %v91, %v930
  %v1898 = vmul.f32 %v92, %v935
  %v1899 = vmul.f32 %v93, %v940
  %v1900 = vmul.f32 %v94, %v945
  %v1901 = vmul.f32 %v95, %v950
  %v1902 = vmul.f32 %v96, %v955
  %v1903 = vmul.f32 %v97, %v960
  %v1904 = vmul.f32 %v98, %v965
  %v1905 = vmul.f32 %v99, %v970
  %v1906 = vmul.f32 %v100, %v975
  %v1907 = vmul.f32 %v101, %v980
  %v1908 = vmul.f32 %v102, %v985
  %v1909 = vmul.f32 %v103, %v990
  %v1910 = vmul.f32 %v104, %v995
  %v1911 = vmul.f32 %v105, %v1000
  %v1912 = vmul.f32 %v106, %v1005
  %v1913 = vmul.f32 %v107, %v1010
  %v1914 = vmul.f32 %v108, %v1015
  %v1915 = vmul.f32 %v109, %v1020
  %v1916 = vmul.f32 %v110, %v1025
  %v1917 = vmul.f32 %v111, %v1030
  %v1918 = vmul.f32 %v112, %v1035
  %v1919 = vmul.f32 %v113, %v1040
  %v1920 = vmul.f32 %v114, %v1045
  %v1921 = vmul.f32 %v115, %v1050
  %v1922 = vmul.f32 %v116, %v1055
  %v1923 = vmul.f32 %v117, %v1060
  %v1924 = vmul.f32 %v118, %v1065
  %v1925 = vmul.f32 %v119, %v1070
  %v1926 = vmul.f32 %v120, %v1075
  %v1927 = vmul.f32 %v121, %v1080
  %v1928 = vmul.f32 %v122, %v1085
  %v1929 = vmul.f32 %v123, %v1090
  %v1930 = vmul.f32 %v124, %v1095
  %v1931 = vmul.f32 %v125, %v1100
  %v1932 = vmul.f32 %v126, %v1105
  %v1933 = vmul.f32 %v127, %v1110
  %v1934 = vmul.f32 %v128, %v1115
  %v1935 = vmul.f32 %v129, %v1120
  %v1936 = vmul.f32 %v130, %v1125
  %v1937 = vmul.f32 %v131, %v1130
  %v1938 = vmul.f32 %v132, %v1135
  %v1939 = vmul.f32 %v133, %v1140
  %v1940 = vmul.f32 %v134, %v1145
  %v1941 = vmul.f32 %v135, %v1150
  %v1942 = vmul.f32 %v136, %v1155
  %v1943 = vmul.f32 %v137, %v1160
  %v1944 = vmul.f32 %v138, %v1165
  %v1945 = vmul.f32 %v139, %v1170
  %v1946 = vmul.f32 %v140, %v1175
  %v1947 = vmul.f32 %v141, %v1180
  %v1948 = vmul.f32 %v142, %v1185
  %v1949 = vmul.f32 %v143, %v1190
  %v1950 = vmul.f32 %v144, %v1195
  %v1951 = vmul.f32 %v145, %v1200
  %v1952 = vmul.f32 %v146, %v1205
  %v1953 = vmul.f32 %v147, %v1210
  %v1954 = vmul.f32 %v148, %v1215
  %v1955 = vmul.f32 %v149, %v1220
  %v1956 = vmul.f32 %v150, %v1225
  %v1957 = vmul.f32 %v151, %v1230
  %v1958 = vmul.f32 %v152, %v1235
  %v1959 = vmul.f32 %v153, %v1240
  %v1960 = vmul.f32 %v154, %v1245
  %v1961 = vmul.f32 %v155, %v1250
  %v1962 = vmul.f32 %v156, %v1255
  %v1963 = vmul.f32 %v157, %v1260
  %v1964 = vmul.f32 %v158, %v1265
  %v1965 = vmul.f32 %v159, %v1270
  %v1966 = vmul.f32 %v160, %v1275
  %v1967 = vmul.f32 %v161, %v1280
  %v1968 = vmul.f32 %v162, %v1285
  %v1969 = vmul.f32 %v163, %v1290
  %v1970 = vmul.f32 %v164, %v1295
  %v1971 = vmul.f32 %v165, %v1300
  %v1972 = vmul.f32 %v166, %v1305
  %v1973 = vmul.f32 %v167, %v1310
  %v1974 = vmul.f32 %v168, %v1315
  %v1975 = vmul.f32 %v169, %v1320
  %v1976 = vmul.f32 %v170, %v1325
  %v1977 = vmul.f32 %v171, %v1330
  %v1978 = vmul.f32 %v172, %v1335
  %v1979 = vmul.f32 %v173, %v1340
  %v1980 = vmul.f32 %v174, %v1345
  %v1981 = vmul.f32 %v175, %v1350
  %v1982 = vmul.f32 %v176, %v1355
  %v1983 = vmul.f32 %v177, %v1360
  %v1984 = vmul.f32 %v178, %v1365
  %v1985 = vmul.f32 %v179, %v1370
  %v1986 = vmul.f32 %v180, %v1375
  %v1987 = vmul.f32 %v181, %v1380
  %v1988 = vmul.f32 %v182, %v1385
  %v1989 = vmul.f32 %v183, %v1390
  %v1990 = vmul.f32 %v184, %v1395
  %v1991 = vmul.f32 %v185, %v1400
  %v1992 = vmul.f32 %v186, %v1405
  %v1993 = vmul.f32 %v187, %v1410
  %v1994 = vmul.f32 %v188, %v1415
  %v1995 = vmul.f32 %v189, %v1420
  %v1996 = vmul.f32 %v190, %v1425
  %v1997 = vmul.f32 %v191, %v1430
  %v1998 = vmul.f32 %v192, %v1435
  %v1999 = vmul.f32 %v193, %v1440
  %v2000 = vmul.f32 %v194, %v1445
  %v2001 = vmul.f32 %v195, %v1450
  %v2002 = vmul.f32 %v196, %v1455
  %v2003 = vmul.f32 %v197, %v1460
  %v2004 = vmul.f32 %v198, %v1465
  %v2005 = vmul.f32 %v199, %v1470
  %v2006 = vmul.f32 %v200, %v1475
  %v2007 = vmul.f32 %v201, %v1480
  %v2008 = vmul.f32 %v202, %v1485
  %v2009 = vmul.f32 %v203, %v1490
  %v2010 = vmul.f32 %v204, %v1495
  %v2011 = vmul.f32 %v205, %v1500
  %v2012 = vmul.f32 %v206, %v1505
  %v2013 = vmul.f32 %v207, %v1510
  %v2014 = vmul.f32 %v208, %v1515
  %v2015 = vmul.f32 %v209, %v1520
  %v2016 = vmul.f32 %v210, %v1525
  %v2017 = vmul.f32 %v211, %v1530
  %v2018 = vmul.f32 %v212, %v1535
  %v2019 = vmul.f32 %v213, %v1540
  %v2020 = vmul.f32 %v214, %v1545
  %v2021 = vmul.f32 %v215, %v1550
  %v2022 = vmul.f32 %v216, %v1555
  %v2023 = vmul.f32 %v217, %v1560
  %v2024 = vmul.f32 %v218, %v1565
  %v2025 = vmul.f32 %v219, %v1570
  %v2026 = vmul.f32 %v220, %v1575
  %v2027 = vmul.f32 %v221, %v1580
  %v2028 = vmul.f32 %v222, %v1585
  %v2029 = vmul.f32 %v223, %v1590
  %v2030 = vmul.f32 %v224, %v1595
  %v2031 = vmul.f32 %v225, %v1600
  %v2032 = vmul.f32 %v226, %v1605
  %v2033 = vmul.f32 %v227, %v1610
  %v2034 = vmul.f32 %v228, %v1615
  %v2035 = vmul.f32 %v229, %v1620
  %v2036 = vmul.f32 %v230, %v1625
  %v2037 = vmul.f32 %v231, %v1630
  %v2038 = vmul.f32 %v232, %v1635
  %v2039 = vmul.f32 %v233, %v1640
  %v2040 = vmul.f32 %v234, %v1645
  %v2041 = vmul.f32 %v235, %v1650
  %v2042 = vmul.f32 %v236, %v1655
  %v2043 = vmul.f32 %v237, %v1660
  %v2044 = vmul.f32 %v238, %v1665
  %v2045 = vmul.f32 %v239, %v1670
  %v2046 = vmul.f32 %v240, %v1675
  %v2047 = vmul.f32 %v241, %v1680
  %v2048 = vmul.f32 %v242, %v1685
  %v2049 = vmul.f32 %v243, %v1690
  %v2050 = vmul.f32 %v244, %v1695
  %v2051 = vmul.f32 %v245, %v1700
  %v2052 = vmul.f32 %v246, %v1705
  %v2053 = vmul.f32 %v247, %v1710
  %v2054 = vmul.f32 %v248, %v1715
  %v2055 = vmul.f32 %v249, %v1720
  %v2056 = vmul.f32 %v250, %v1725
  %v2057 = vmul.f32 %v251, %v1730
  %v2058 = vmul.f32 %v252, %v1735
  %v2059 = vmul.f32 %v253, %v1740
  %v2060 = vmul.f32 %v254, %v1745
  %v2061 = vmul.f32 %v255, %v1750
  %v2062 = vmul.f32 %v256, %v1755
  %v2063 = vmul.f32 %v257, %v1760
  %v2064 = vmul.f32 %v258, %v1765
  %v2065 = vmul.f32 %v259, %v1770
  %v2066 = vmul.f32 %v260, %v1775
  %v2067 = vmul.f32 %v261, %v1780
  %v2068 = vmul.f32 %v262, %v1785
  %v2069 = vmul.f32 %v263, %v1790
  %v2070 = vmul.f32 %v264, %v1795
  %v2071 = vmul.f32 %v265, %v1800
  %v2072 = vmul.f32 %v266, %v1805
  %v2073 = vmul.f32 %v267, %v1810
  %v2074 = vmul.f32 %v268, %v1815
  %vm2075 = vcmask 400384
  %2076 = vst.msk [vmem:[%s2] sm:$0xff] %vm2075, %v1817
  %2077 = vst.msk [vmem:[%s2 + $0x8] sm:$0xff] %vm2075, %v1818
  %2078 = vst.msk [vmem:[%s2 + $0x10] sm:$0xff] %vm2075, %v1819
  %2079 = vst.msk [vmem:[%s2 + $0x18] sm:$0xff] %vm2075, %v1820
  %2080 = vst.msk [vmem:[%s2 + $0x20] sm:$0xff] %vm2075, %v1821
  %2081 = vst.msk [vmem:[%s2 + $0x28] sm:$0xff] %vm2075, %v1822
  %2082 = vst.msk [vmem:[%s2 + $0x30] sm:$0xff] %vm2075, %v1823
  %2083 = vst.msk [vmem:[%s2 + $0x38] sm:$0xff] %vm2075, %v1824
  %2084 = vst.msk [vmem:[%s2 + $0x40] sm:$0xff] %vm2075, %v1825
  %2085 = vst.msk [vmem:[%s2 + $0x48] sm:$0xff] %vm2075, %v1826
  %2086 = vst.msk [vmem:[%s2 + $0x50] sm:$0xff] %vm2075, %v1827
  %2087 = vst.msk [vmem:[%s2 + $0x58] sm:$0xff] %vm2075, %v1828
  %2088 = vst.msk [vmem:[%s2 + $0x60] sm:$0xff] %vm2075, %v1829
  %2089 = vst.msk [vmem:[%s2 + $0x68] sm:$0xff] %vm2075, %v1830
  %2090 = vst.msk [vmem:[%s2 + $0x70] sm:$0xff] %vm2075, %v1831
  %2091 = vst.msk [vmem:[%s2 + $0x78] sm:$0xff] %vm2075, %v1832
  %2092 = vst.msk [vmem:[%s2 + $0x80] sm:$0xff] %vm2075, %v1833
  %2093 = vst.msk [vmem:[%s2 + $0x88] sm:$0xff] %vm2075, %v1834
  %2094 = vst.msk [vmem:[%s2 + $0x90] sm:$0xff] %vm2075, %v1835
  %2095 = vst.msk [vmem:[%s2 + $0x98] sm:$0xff] %vm2075, %v1836
  %2096 = vst.msk [vmem:[%s2 + $0xa0] sm:$0xff] %vm2075, %v1837
  %2097 = vst.msk [vmem:[%s2 + $0xa8] sm:$0xff] %vm2075, %v1838
  %2098 = vst.msk [vmem:[%s2 + $0xb0] sm:$0xff] %vm2075, %v1839
  %2099 = vst.msk [vmem:[%s2 + $0xb8] sm:$0xff] %vm2075, %v1840
  %2100 = vst.msk [vmem:[%s2 + $0xc0] sm:$0xff] %vm2075, %v1841
  %2101 = vst.msk [vmem:[%s2 + $0xc8] sm:$0xff] %vm2075, %v1842
  %2102 = vst.msk [vmem:[%s2 + $0xd0] sm:$0xff] %vm2075, %v1843
  %2103 = vst.msk [vmem:[%s2 + $0xd8] sm:$0xff] %vm2075, %v1844
  %2104 = vst.msk [vmem:[%s2 + $0xe0] sm:$0xff] %vm2075, %v1845
  %2105 = vst.msk [vmem:[%s2 + $0xe8] sm:$0xff] %vm2075, %v1846
  %2106 = vst.msk [vmem:[%s2 + $0xf0] sm:$0xff] %vm2075, %v1847
  %2107 = vst.msk [vmem:[%s2 + $0xf8] sm:$0xff] %vm2075, %v1848
  %2108 = vst.msk [vmem:[%s2 + $0x100] sm:$0xff] %vm2075, %v1849
  %2109 = vst.msk [vmem:[%s2 + $0x108] sm:$0xff] %vm2075, %v1850
  %2110 = vst.msk [vmem:[%s2 + $0x110] sm:$0xff] %vm2075, %v1851
  %2111 = vst.msk [vmem:[%s2 + $0x118] sm:$0xff] %vm2075, %v1852
  %2112 = vst.msk [vmem:[%s2 + $0x120] sm:$0xff] %vm2075, %v1853
  %2113 = vst.msk [vmem:[%s2 + $0x128] sm:$0xff] %vm2075, %v1854
  %2114 = vst.msk [vmem:[%s2 + $0x130] sm:$0xff] %vm2075, %v1855
  %2115 = vst.msk [vmem:[%s2 + $0x138] sm:$0xff] %vm2075, %v1856
  %2116 = vst.msk [vmem:[%s2 + $0x140] sm:$0xff] %vm2075, %v1857
  %2117 = vst.msk [vmem:[%s2 + $0x148] sm:$0xff] %vm2075, %v1858
  %2118 = vst.msk [vmem:[%s2 + $0x150] sm:$0xff] %vm2075, %v1859
  %2119 = vst.msk [vmem:[%s2 + $0x158] sm:$0xff] %vm2075, %v1860
  %2120 = vst.msk [vmem:[%s2 + $0x160] sm:$0xff] %vm2075, %v1861
  %2121 = vst.msk [vmem:[%s2 + $0x168] sm:$0xff] %vm2075, %v1862
  %2122 = vst.msk [vmem:[%s2 + $0x170] sm:$0xff] %vm2075, %v1863
  %2123 = vst.msk [vmem:[%s2 + $0x178] sm:$0xff] %vm2075, %v1864
  %2124 = vst.msk [vmem:[%s2 + $0x180] sm:$0xff] %vm2075, %v1865
  %2125 = vst.msk [vmem:[%s2 + $0x188] sm:$0xff] %vm2075, %v1866
  %2126 = vst.msk [vmem:[%s2 + $0x190] sm:$0xff] %vm2075, %v1867
  %2127 = vst.msk [vmem:[%s2 + $0x198] sm:$0xff] %vm2075, %v1868
  %2128 = vst.msk [vmem:[%s2 + $0x1a0] sm:$0xff] %vm2075, %v1869
  %2129 = vst.msk [vmem:[%s2 + $0x1a8] sm:$0xff] %vm2075, %v1870
  %2130 = vst.msk [vmem:[%s2 + $0x1b0] sm:$0xff] %vm2075, %v1871
  %2131 = vst.msk [vmem:[%s2 + $0x1b8] sm:$0xff] %vm2075, %v1872
  %2132 = vst.msk [vmem:[%s2 + $0x1c0] sm:$0xff] %vm2075, %v1873
  %2133 = vst.msk [vmem:[%s2 + $0x1c8] sm:$0xff] %vm2075, %v1874
  %2134 = vst.msk [vmem:[%s2 + $0x1d0] sm:$0xff] %vm2075, %v1875
  %2135 = vst.msk [vmem:[%s2 + $0x1d8] sm:$0xff] %vm2075, %v1876
  %2136 = vst.msk [vmem:[%s2 + $0x1e0] sm:$0xff] %vm2075, %v1877
  %2137 = vst.msk [vmem:[%s2 + $0x1e8] sm:$0xff] %vm2075, %v1878
  %2138 = vst.msk [vmem:[%s2 + $0x1f0] sm:$0xff] %vm2075, %v1879
  %2139 = vst.msk [vmem:[%s2 + $0x1f8] sm:$0xff] %vm2075, %v1880
  %2140 = vst.msk [vmem:[%s2 + $0x200] sm:$0xff] %vm2075, %v1881
  %2141 = vst.msk [vmem:[%s2 + $0x208] sm:$0xff] %vm2075, %v1882
  %2142 = vst.msk [vmem:[%s2 + $0x210] sm:$0xff] %vm2075, %v1883
  %2143 = vst.msk [vmem:[%s2 + $0x218] sm:$0xff] %vm2075, %v1884
  %2144 = vst.msk [vmem:[%s2 + $0x220] sm:$0xff] %vm2075, %v1885
  %2145 = vst.msk [vmem:[%s2 + $0x228] sm:$0xff] %vm2075, %v1886
  %2146 = vst.msk [vmem:[%s2 + $0x230] sm:$0xff] %vm2075, %v1887
  %2147 = vst.msk [vmem:[%s2 + $0x238] sm:$0xff] %vm2075, %v1888
  %2148 = vst.msk [vmem:[%s2 + $0x240] sm:$0xff] %vm2075, %v1889
  %2149 = vst.msk [vmem:[%s2 + $0x248] sm:$0xff] %vm2075, %v1890
  %2150 = vst.msk [vmem:[%s2 + $0x250] sm:$0xff] %vm2075, %v1891
  %2151 = vst.msk [vmem:[%s2 + $0x258] sm:$0xff] %vm2075, %v1892
  %2152 = vst.msk [vmem:[%s2 + $0x260] sm:$0xff] %vm2075, %v1893
  %2153 = vst.msk [vmem:[%s2 + $0x268] sm:$0xff] %vm2075, %v1894
  %2154 = vst.msk [vmem:[%s2 + $0x270] sm:$0xff] %vm2075, %v1895
  %2155 = vst.msk [vmem:[%s2 + $0x278] sm:$0xff] %vm2075, %v1896
  %2156 = vst.msk [vmem:[%s2 + $0x280] sm:$0xff] %vm2075, %v1897
  %2157 = vst.msk [vmem:[%s2 + $0x288] sm:$0xff] %vm2075, %v1898
  %2158 = vst.msk [vmem:[%s2 + $0x290] sm:$0xff] %vm2075, %v1899
  %2159 = vst.msk [vmem:[%s2 + $0x298] sm:$0xff] %vm2075, %v1900
  %2160 = vst.msk [vmem:[%s2 + $0x2a0] sm:$0xff] %vm2075, %v1901
  %2161 = vst.msk [vmem:[%s2 + $0x2a8] sm:$0xff] %vm2075, %v1902
  %2162 = vst.msk [vmem:[%s2 + $0x2b0] sm:$0xff] %vm2075, %v1903
  %2163 = vst.msk [vmem:[%s2 + $0x2b8] sm:$0xff] %vm2075, %v1904
  %2164 = vst.msk [vmem:[%s2 + $0x2c0] sm:$0xff] %vm2075, %v1905
  %2165 = vst.msk [vmem:[%s2 + $0x2c8] sm:$0xff] %vm2075, %v1906
  %2166 = vst.msk [vmem:[%s2 + $0x2d0] sm:$0xff] %vm2075, %v1907
  %2167 = vst.msk [vmem:[%s2 + $0x2d8] sm:$0xff] %vm2075, %v1908
  %2168 = vst.msk [vmem:[%s2 + $0x2e0] sm:$0xff] %vm2075, %v1909
  %2169 = vst.msk [vmem:[%s2 + $0x2e8] sm:$0xff] %vm2075, %v1910
  %2170 = vst.msk [vmem:[%s2 + $0x2f0] sm:$0xff] %vm2075, %v1911
  %2171 = vst.msk [vmem:[%s2 + $0x2f8] sm:$0xff] %vm2075, %v1912
  %2172 = vst.msk [vmem:[%s2 + $0x300] sm:$0xff] %vm2075, %v1913
  %2173 = vst.msk [vmem:[%s2 + $0x308] sm:$0xff] %vm2075, %v1914
  %2174 = vst.msk [vmem:[%s2 + $0x310] sm:$0xff] %vm2075, %v1915
  %2175 = vst.msk [vmem:[%s2 + $0x318] sm:$0xff] %vm2075, %v1916
  %2176 = vst.msk [vmem:[%s2 + $0x320] sm:$0xff] %vm2075, %v1917
  %2177 = vst.msk [vmem:[%s2 + $0x328] sm:$0xff] %vm2075, %v1918
  %2178 = vst.msk [vmem:[%s2 + $0x330] sm:$0xff] %vm2075, %v1919
  %2179 = vst.msk [vmem:[%s2 + $0x338] sm:$0xff] %vm2075, %v1920
  %2180 = vst.msk [vmem:[%s2 + $0x340] sm:$0xff] %vm2075, %v1921
  %2181 = vst.msk [vmem:[%s2 + $0x348] sm:$0xff] %vm2075, %v1922
  %2182 = vst.msk [vmem:[%s2 + $0x350] sm:$0xff] %vm2075, %v1923
  %2183 = vst.msk [vmem:[%s2 + $0x358] sm:$0xff] %vm2075, %v1924
  %2184 = vst.msk [vmem:[%s2 + $0x360] sm:$0xff] %vm2075, %v1925
  %2185 = vst.msk [vmem:[%s2 + $0x368] sm:$0xff] %vm2075, %v1926
  %2186 = vst.msk [vmem:[%s2 + $0x370] sm:$0xff] %vm2075, %v1927
  %2187 = vst.msk [vmem:[%s2 + $0x378] sm:$0xff] %vm2075, %v1928
  %2188 = vst.msk [vmem:[%s2 + $0x380] sm:$0xff] %vm2075, %v1929
  %2189 = vst.msk [vmem:[%s2 + $0x388] sm:$0xff] %vm2075, %v1930
  %2190 = vst.msk [vmem:[%s2 + $0x390] sm:$0xff] %vm2075, %v1931
  %2191 = vst.msk [vmem:[%s2 + $0x398] sm:$0xff] %vm2075, %v1932
  %2192 = vst.msk [vmem:[%s2 + $0x3a0] sm:$0xff] %vm2075, %v1933
  %2193 = vst.msk [vmem:[%s2 + $0x3a8] sm:$0xff] %vm2075, %v1934
  %2194 = vst.msk [vmem:[%s2 + $0x3b0] sm:$0xff] %vm2075, %v1935
  %2195 = vst.msk [vmem:[%s2 + $0x3b8] sm:$0xff] %vm2075, %v1936
  %2196 = vst.msk [vmem:[%s2 + $0x3c0] sm:$0xff] %vm2075, %v1937
  %2197 = vst.msk [vmem:[%s2 + $0x3c8] sm:$0xff] %vm2075, %v1938
  %2198 = vst.msk [vmem:[%s2 + $0x3d0] sm:$0xff] %vm2075, %v1939
  %2199 = vst.msk [vmem:[%s2 + $0x3d8] sm:$0xff] %vm2075, %v1940
  %2200 = vst.msk [vmem:[%s2 + $0x3e0] sm:$0xff] %vm2075, %v1941
  %2201 = vst.msk [vmem:[%s2 + $0x3e8] sm:$0xff] %vm2075, %v1942
  %2202 = vst.msk [vmem:[%s2 + $0x3f0] sm:$0xff] %vm2075, %v1943
  %2203 = vst.msk [vmem:[%s2 + $0x3f8] sm:$0xff] %vm2075, %v1944
  %2204 = vst.msk [vmem:[%s2 + $0x400] sm:$0xff] %vm2075, %v1945
  %2205 = vst.msk [vmem:[%s2 + $0x408] sm:$0xff] %vm2075, %v1946
  %2206 = vst.msk [vmem:[%s2 + $0x410] sm:$0xff] %vm2075, %v1947
  %2207 = vst.msk [vmem:[%s2 + $0x418] sm:$0xff] %vm2075, %v1948
  %2208 = vst.msk [vmem:[%s2 + $0x420] sm:$0xff] %vm2075, %v1949
  %2209 = vst.msk [vmem:[%s2 + $0x428] sm:$0xff] %vm2075, %v1950
  %2210 = vst.msk [vmem:[%s2 + $0x430] sm:$0xff] %vm2075, %v1951
  %2211 = vst.msk [vmem:[%s2 + $0x438] sm:$0xff] %vm2075, %v1952
  %2212 = vst.msk [vmem:[%s2 + $0x440] sm:$0xff] %vm2075, %v1953
  %2213 = vst.msk [vmem:[%s2 + $0x448] sm:$0xff] %vm2075, %v1954
  %2214 = vst.msk [vmem:[%s2 + $0x450] sm:$0xff] %vm2075, %v1955
  %2215 = vst.msk [vmem:[%s2 + $0x458] sm:$0xff] %vm2075, %v1956
  %2216 = vst.msk [vmem:[%s2 + $0x460] sm:$0xff] %vm2075, %v1957
  %2217 = vst.msk [vmem:[%s2 + $0x468] sm:$0xff] %vm2075, %v1958
  %2218 = vst.msk [vmem:[%s2 + $0x470] sm:$0xff] %vm2075, %v1959
  %2219 = vst.msk [vmem:[%s2 + $0x478] sm:$0xff] %vm2075, %v1960
  %2220 = vst.msk [vmem:[%s2 + $0x480] sm:$0xff] %vm2075, %v1961
  %2221 = vst.msk [vmem:[%s2 + $0x488] sm:$0xff] %vm2075, %v1962
  %2222 = vst.msk [vmem:[%s2 + $0x490] sm:$0xff] %vm2075, %v1963
  %2223 = vst.msk [vmem:[%s2 + $0x498] sm:$0xff] %vm2075, %v1964
  %2224 = vst.msk [vmem:[%s2 + $0x4a0] sm:$0xff] %vm2075, %v1965
  %2225 = vst.msk [vmem:[%s2 + $0x4a8] sm:$0xff] %vm2075, %v1966
  %2226 = vst.msk [vmem:[%s2 + $0x4b0] sm:$0xff] %vm2075, %v1967
  %2227 = vst.msk [vmem:[%s2 + $0x4b8] sm:$0xff] %vm2075, %v1968
  %2228 = vst.msk [vmem:[%s2 + $0x4c0] sm:$0xff] %vm2075, %v1969
  %2229 = vst.msk [vmem:[%s2 + $0x4c8] sm:$0xff] %vm2075, %v1970
  %2230 = vst.msk [vmem:[%s2 + $0x4d0] sm:$0xff] %vm2075, %v1971
  %2231 = vst.msk [vmem:[%s2 + $0x4d8] sm:$0xff] %vm2075, %v1972
  %2232 = vst.msk [vmem:[%s2 + $0x4e0] sm:$0xff] %vm2075, %v1973
  %2233 = vst.msk [vmem:[%s2 + $0x4e8] sm:$0xff] %vm2075, %v1974
  %2234 = vst.msk [vmem:[%s2 + $0x4f0] sm:$0xff] %vm2075, %v1975
  %2235 = vst.msk [vmem:[%s2 + $0x4f8] sm:$0xff] %vm2075, %v1976
  %2236 = vst.msk [vmem:[%s2 + $0x500] sm:$0xff] %vm2075, %v1977
  %2237 = vst.msk [vmem:[%s2 + $0x508] sm:$0xff] %vm2075, %v1978
  %2238 = vst.msk [vmem:[%s2 + $0x510] sm:$0xff] %vm2075, %v1979
  %2239 = vst.msk [vmem:[%s2 + $0x518] sm:$0xff] %vm2075, %v1980
  %2240 = vst.msk [vmem:[%s2 + $0x520] sm:$0xff] %vm2075, %v1981
  %2241 = vst.msk [vmem:[%s2 + $0x528] sm:$0xff] %vm2075, %v1982
  %2242 = vst.msk [vmem:[%s2 + $0x530] sm:$0xff] %vm2075, %v1983
  %2243 = vst.msk [vmem:[%s2 + $0x538] sm:$0xff] %vm2075, %v1984
  %2244 = vst.msk [vmem:[%s2 + $0x540] sm:$0xff] %vm2075, %v1985
  %2245 = vst.msk [vmem:[%s2 + $0x548] sm:$0xff] %vm2075, %v1986
  %2246 = vst.msk [vmem:[%s2 + $0x550] sm:$0xff] %vm2075, %v1987
  %2247 = vst.msk [vmem:[%s2 + $0x558] sm:$0xff] %vm2075, %v1988
  %2248 = vst.msk [vmem:[%s2 + $0x560] sm:$0xff] %vm2075, %v1989
  %2249 = vst.msk [vmem:[%s2 + $0x568] sm:$0xff] %vm2075, %v1990
  %2250 = vst.msk [vmem:[%s2 + $0x570] sm:$0xff] %vm2075, %v1991
  %2251 = vst.msk [vmem:[%s2 + $0x578] sm:$0xff] %vm2075, %v1992
  %2252 = vst.msk [vmem:[%s2 + $0x580] sm:$0xff] %vm2075, %v1993
  %2253 = vst.msk [vmem:[%s2 + $0x588] sm:$0xff] %vm2075, %v1994
  %2254 = vst.msk [vmem:[%s2 + $0x590] sm:$0xff] %vm2075, %v1995
  %2255 = vst.msk [vmem:[%s2 + $0x598] sm:$0xff] %vm2075, %v1996
  %2256 = vst.msk [vmem:[%s2 + $0x5a0] sm:$0xff] %vm2075, %v1997
  %2257 = vst.msk [vmem:[%s2 + $0x5a8] sm:$0xff] %vm2075, %v1998
  %2258 = vst.msk [vmem:[%s2 + $0x5b0] sm:$0xff] %vm2075, %v1999
  %2259 = vst.msk [vmem:[%s2 + $0x5b8] sm:$0xff] %vm2075, %v2000
  %2260 = vst.msk [vmem:[%s2 + $0x5c0] sm:$0xff] %vm2075, %v2001
  %2261 = vst.msk [vmem:[%s2 + $0x5c8] sm:$0xff] %vm2075, %v2002
  %2262 = vst.msk [vmem:[%s2 + $0x5d0] sm:$0xff] %vm2075, %v2003
  %2263 = vst.msk [vmem:[%s2 + $0x5d8] sm:$0xff] %vm2075, %v2004
  %2264 = vst.msk [vmem:[%s2 + $0x5e0] sm:$0xff] %vm2075, %v2005
  %2265 = vst.msk [vmem:[%s2 + $0x5e8] sm:$0xff] %vm2075, %v2006
  %2266 = vst.msk [vmem:[%s2 + $0x5f0] sm:$0xff] %vm2075, %v2007
  %2267 = vst.msk [vmem:[%s2 + $0x5f8] sm:$0xff] %vm2075, %v2008
  %2268 = vst.msk [vmem:[%s2 + $0x600] sm:$0xff] %vm2075, %v2009
  %2269 = vst.msk [vmem:[%s2 + $0x608] sm:$0xff] %vm2075, %v2010
  %2270 = vst.msk [vmem:[%s2 + $0x610] sm:$0xff] %vm2075, %v2011
  %2271 = vst.msk [vmem:[%s2 + $0x618] sm:$0xff] %vm2075, %v2012
  %2272 = vst.msk [vmem:[%s2 + $0x620] sm:$0xff] %vm2075, %v2013
  %2273 = vst.msk [vmem:[%s2 + $0x628] sm:$0xff] %vm2075, %v2014
  %2274 = vst.msk [vmem:[%s2 + $0x630] sm:$0xff] %vm2075, %v2015
  %2275 = vst.msk [vmem:[%s2 + $0x638] sm:$0xff] %vm2075, %v2016
  %2276 = vst.msk [vmem:[%s2 + $0x640] sm:$0xff] %vm2075, %v2017
  %2277 = vst.msk [vmem:[%s2 + $0x648] sm:$0xff] %vm2075, %v2018
  %2278 = vst.msk [vmem:[%s2 + $0x650] sm:$0xff] %vm2075, %v2019
  %2279 = vst.msk [vmem:[%s2 + $0x658] sm:$0xff] %vm2075, %v2020
  %2280 = vst.msk [vmem:[%s2 + $0x660] sm:$0xff] %vm2075, %v2021
  %2281 = vst.msk [vmem:[%s2 + $0x668] sm:$0xff] %vm2075, %v2022
  %2282 = vst.msk [vmem:[%s2 + $0x670] sm:$0xff] %vm2075, %v2023
  %2283 = vst.msk [vmem:[%s2 + $0x678] sm:$0xff] %vm2075, %v2024
  %2284 = vst.msk [vmem:[%s2 + $0x680] sm:$0xff] %vm2075, %v2025
  %2285 = vst.msk [vmem:[%s2 + $0x688] sm:$0xff] %vm2075, %v2026
  %2286 = vst.msk [vmem:[%s2 + $0x690] sm:$0xff] %vm2075, %v2027
  %2287 = vst.msk [vmem:[%s2 + $0x698] sm:$0xff] %vm2075, %v2028
  %2288 = vst.msk [vmem:[%s2 + $0x6a0] sm:$0xff] %vm2075, %v2029
  %2289 = vst.msk [vmem:[%s2 + $0x6a8] sm:$0xff] %vm2075, %v2030
  %2290 = vst.msk [vmem:[%s2 + $0x6b0] sm:$0xff] %vm2075, %v2031
  %2291 = vst.msk [vmem:[%s2 + $0x6b8] sm:$0xff] %vm2075, %v2032
  %2292 = vst.msk [vmem:[%s2 + $0x6c0] sm:$0xff] %vm2075, %v2033
  %2293 = vst.msk [vmem:[%s2 + $0x6c8] sm:$0xff] %vm2075, %v2034
  %2294 = vst.msk [vmem:[%s2 + $0x6d0] sm:$0xff] %vm2075, %v2035
  %2295 = vst.msk [vmem:[%s2 + $0x6d8] sm:$0xff] %vm2075, %v2036
  %2296 = vst.msk [vmem:[%s2 + $0x6e0] sm:$0xff] %vm2075, %v2037
  %2297 = vst.msk [vmem:[%s2 + $0x6e8] sm:$0xff] %vm2075, %v2038
  %2298 = vst.msk [vmem:[%s2 + $0x6f0] sm:$0xff] %vm2075, %v2039
  %2299 = vst.msk [vmem:[%s2 + $0x6f8] sm:$0xff] %vm2075, %v2040
  %2300 = vst.msk [vmem:[%s2 + $0x700] sm:$0xff] %vm2075, %v2041
  %2301 = vst.msk [vmem:[%s2 + $0x708] sm:$0xff] %vm2075, %v2042
  %2302 = vst.msk [vmem:[%s2 + $0x710] sm:$0xff] %vm2075, %v2043
  %2303 = vst.msk [vmem:[%s2 + $0x718] sm:$0xff] %vm2075, %v2044
  %2304 = vst.msk [vmem:[%s2 + $0x720] sm:$0xff] %vm2075, %v2045
  %2305 = vst.msk [vmem:[%s2 + $0x728] sm:$0xff] %vm2075, %v2046
  %2306 = vst.msk [vmem:[%s2 + $0x730] sm:$0xff] %vm2075, %v2047
  %2307 = vst.msk [vmem:[%s2 + $0x738] sm:$0xff] %vm2075, %v2048
  %2308 = vst.msk [vmem:[%s2 + $0x740] sm:$0xff] %vm2075, %v2049
  %2309 = vst.msk [vmem:[%s2 + $0x748] sm:$0xff] %vm2075, %v2050
  %2310 = vst.msk [vmem:[%s2 + $0x750] sm:$0xff] %vm2075, %v2051
  %2311 = vst.msk [vmem:[%s2 + $0x758] sm:$0xff] %vm2075, %v2052
  %2312 = vst.msk [vmem:[%s2 + $0x760] sm:$0xff] %vm2075, %v2053
  %2313 = vst.msk [vmem:[%s2 + $0x768] sm:$0xff] %vm2075, %v2054
  %2314 = vst.msk [vmem:[%s2 + $0x770] sm:$0xff] %vm2075, %v2055
  %2315 = vst.msk [vmem:[%s2 + $0x778] sm:$0xff] %vm2075, %v2056
  %2316 = vst.msk [vmem:[%s2 + $0x780] sm:$0xff] %vm2075, %v2057
  %2317 = vst.msk [vmem:[%s2 + $0x788] sm:$0xff] %vm2075, %v2058
  %2318 = vst.msk [vmem:[%s2 + $0x790] sm:$0xff] %vm2075, %v2059
  %2319 = vst.msk [vmem:[%s2 + $0x798] sm:$0xff] %vm2075, %v2060
  %2320 = vst.msk [vmem:[%s2 + $0x7a0] sm:$0xff] %vm2075, %v2061
  %2321 = vst.msk [vmem:[%s2 + $0x7a8] sm:$0xff] %vm2075, %v2062
  %2322 = vst.msk [vmem:[%s2 + $0x7b0] sm:$0xff] %vm2075, %v2063
  %2323 = vst.msk [vmem:[%s2 + $0x7b8] sm:$0xff] %vm2075, %v2064
  %2324 = vst.msk [vmem:[%s2 + $0x7c0] sm:$0xff] %vm2075, %v2065
  %2325 = vst.msk [vmem:[%s2 + $0x7c8] sm:$0xff] %vm2075, %v2066
  %2326 = vst.msk [vmem:[%s2 + $0x7d0] sm:$0xff] %vm2075, %v2067
  %2327 = vst.msk [vmem:[%s2 + $0x7d8] sm:$0xff] %vm2075, %v2068
  %2328 = vst.msk [vmem:[%s2 + $0x7e0] sm:$0xff] %vm2075, %v2069
  %2329 = vst.msk [vmem:[%s2 + $0x7e8] sm:$0xff] %vm2075, %v2070
  %2330 = vst.msk [vmem:[%s2 + $0x7f0] sm:$0xff] %vm2075, %v2071
  %2331 = vst.msk [vmem:[%s2 + $0x7f8] sm:$0xff] %vm2075, %v2072
  %2332 = vst.msk [vmem:[%s2 + $0x800] sm:$0xff] %vm2075, %v2073
  %2333 = vst.msk [vmem:[%s2 + $0x808] sm:$0xff] %vm2075, %v2074
  // Predicated region
  $region10: #{tpu_custom_call.1} parent=0 // pred_check
    _
  $region11: #{tpu_custom_call.1} parent=0 // pred_check_branch
    %2335 = sbr.rel (0) target = $region13
  $region12: #{tpu_custom_call.1} parent=0 // pred_region
    _
  $region13: #{tpu_custom_call.1} parent=0 // pred_fallthru
    _
  // Predicated region
  $region14: #{tpu_custom_call.1} parent=0 // pred_check
    _
  $region15: #{tpu_custom_call.1} parent=0 // pred_check_branch
    %2337 = sbr.rel (0) target = $region17
  $region16: #{tpu_custom_call.1} parent=0 // pred_region
    _
  $region17: #{tpu_custom_call.1} parent=0 // pred_fallthru
    _

</llo_original>
